<compile_context>
chip_gen: v5e
topology: v5e:2x2
jax: 0.10.0
libtpu: 0.0.40
codegen_flags: <defaults>
</compile_context>

<pallas_src>
import jax
import jax.numpy as jnp
from jax.experimental import pallas as pl
from jax.experimental.pallas import tpu as pltpu


# ---------------------------------------------------------------------------
# static geometry helpers
# ---------------------------------------------------------------------------
def _same_pad(size, k, s):
    """TF 'SAME': output size and pad-before amount (extra pixel goes after)."""
    out = -(-size // s)
    pad = max((out - 1) * s + k - size, 0)
    return out, pad // 2


def _full_spec(shape):
    zeros = (0,) * len(shape)
    return pl.BlockSpec(shape, lambda i, _z=zeros: _z)


# ---------------------------------------------------------------------------
# weight preprocessing (tiny XLA einsums on weight-sized tensors)
# ---------------------------------------------------------------------------
def _enc_tap_mats(w, w_in, ow, stride, pad_l):
    """Conv2d weight (C_out, C_in, kh, kw) -> (kh, w_in*C_in, ow*C_out).

    out_row(oy) = sum_i in_row(stride*oy + i - pad_t) @ M[i]  implements the
    SAME-padded strided conv; out-of-range taps hit explicit zero rows.
    """
    c_out, c_in, kh, kw = w.shape
    x = jnp.arange(w_in)[None, :, None]
    ox = jnp.arange(ow)[None, None, :]
    j = jnp.arange(kw)[:, None, None]
    sel = (x == stride * ox + j - pad_l).astype(jnp.float32)        # (kw, w_in, ow)
    m = jnp.einsum('jxo,dcij->ixcod', sel, w.astype(jnp.float32),
                   precision=jax.lax.Precision.HIGHEST)
    return m.reshape(kh, w_in * c_in, ow * c_out)


def _dec_tap_mats(wt, w_in, stride):
    """ConvTranspose2d weight (C_in, C_out, 3, 3) -> stack [A_even, B_even, A_odd].

    Phase decomposition of ConvTranspose2d(stride=2) + ConvTranspose2dSamePad:
        out[2y  ] = relu(in[y] @ A_even + in[y-1] @ B_even + b)
        out[2y+1] = relu(in[y] @ A_odd                     + b)
    (in[-1] is the zero row kept at index 0 of the decoder input slab).
    """
    c_in, c_out, kh, kw = wt.shape
    assert kh == 3 and kw == 3 and stride == 2, (
        "fused decoder path implemented for kernel=3, stride=2 (as in DSCNet)")
    w_out = stride * w_in
    x = jnp.arange(w_in)[None, :, None]
    X = jnp.arange(w_out)[None, None, :]
    j = jnp.arange(kw)[:, None, None]
    sel = (X == stride * x + j).astype(jnp.float32)                 # (kw, w_in, w_out)

    def tap(i):
        m = jnp.einsum('jxX,cdj->xcXd', sel, wt[:, :, i, :].astype(jnp.float32),
                       precision=jax.lax.Precision.HIGHEST)
        return m.reshape(w_in * c_in, w_out * c_out)

    return jnp.stack([tap(0), tap(2), tap(1)])


# ---------------------------------------------------------------------------
# the fused Pallas kernel
# ---------------------------------------------------------------------------
def _make_fused_kernel(cfg):
    n = cfg["n"]
    enc = cfg["enc"]
    dec = cfg["dec"]
    enc_rows = cfg["enc_rows"]          # rows of each encoder *output* slab
    num_e, num_d = len(enc), len(dec)
    hh, ww, c_last = cfg["hh"], cfg["ww"], cfg["c_last"]
    f32, bf16 = jnp.float32, jnp.bfloat16

    def kernel(*refs):
        it = iter(refs)
        x0 = next(it)
        enc_m, enc_b = [], []
        for _ in range(num_e):
            enc_m.append(next(it))
            enc_b.append(next(it))
        coef = next(it)
        dec_m, dec_b = [], []
        for _ in range(num_d):
            dec_m.append(next(it))
            dec_b.append(next(it))
        xr_ref, z_ref, zr_ref = next(it), next(it), next(it)
        enc_out = [next(it) for _ in range(num_e)]          # scratch slabs
        dec_in = [next(it) for _ in range(num_d)]           # scratch slabs

        # ---- encoder: each SAME-pad stride-2 conv = kh slab GEMMs (M=oh*n) --
        src_ref = x0
        for l, L in enumerate(enc):
            oh, s, kh = L["oh"], L["s"], L["k"]
            kin = L["w_in"] * L["cin"]
            kout = L["ow"] * L["cout"]
            src = src_ref[...].astype(bf16)                 # (rows_in, n, kin)
            bias = enc_b[l][...]                            # (1, kout), hoisted
            acc = jnp.zeros((oh * n, kout), f32)
            for i in range(kh):
                tap = (src[i:i + oh * s]
                       .reshape(oh, s, n, kin)[:, 0]        # rows i, i+s, ...
                       .reshape(oh * n, kin))
                acc = acc + jnp.dot(tap, enc_m[l][i],
                                    preferred_element_type=f32)
            out = jnp.maximum(acc + bias, 0.0).reshape(oh, n, kout)

            dst = enc_out[l]
            if l + 1 < num_e:        # keep zero pad rows for next layer's taps
                pt = enc[l + 1]["pad_t"]
                rows = enc_rows[l]
                if pt > 0:
                    dst[0:pt, :, :] = jnp.zeros((pt, n, kout), f32)
                dst[pt:pt + oh, :, :] = out
                if pt + oh < rows:
                    dst[pt + oh:rows, :, :] = jnp.zeros(
                        (rows - pt - oh, n, kout), f32)
            else:
                dst[...] = out
            src_ref = dst

        # ---- self-expression, in native (h, w, c) feature order -------------
        wc = ww * c_last
        z = jnp.concatenate([enc_out[-1][r] for r in range(hh)], axis=-1)
        z_ref[...] = z                                      # (n, dz) lane-dense
        zr = jnp.dot(coef[...], z.astype(bf16), preferred_element_type=f32)
        zr_ref[...] = zr
        dec_in[0][0, :, :] = jnp.zeros((n, wc), f32)        # zero row = in[-1]
        for r in range(hh):
            dec_in[0][1 + r, :, :] = zr[:, r * wc:(r + 1) * wc]

        # ---- decoder: phase-decomposed ConvT, 3 slab GEMMs per layer --------
        for m, L in enumerate(dec):
            h_in = L["h_in"]
            kin = L["w_in"] * L["cin"]
            kout = 2 * L["w_in"] * L["cout"]
            src = dec_in[m][...].astype(bf16)               # (h_in+1, n, kin)
            cur = src[1:h_in + 1].reshape(h_in * n, kin)    # in[y]
            prv = src[0:h_in].reshape(h_in * n, kin)        # in[y-1]
            bias = dec_b[m][...]                            # (1, kout), hoisted
            ev = (jnp.dot(cur, dec_m[m][0], preferred_element_type=f32)
                  + jnp.dot(prv, dec_m[m][1], preferred_element_type=f32)
                  + bias)
            od = jnp.dot(cur, dec_m[m][2], preferred_element_type=f32) + bias
            ev = jnp.maximum(ev, 0.0).reshape(h_in, n, kout)
            od = jnp.maximum(od, 0.0).reshape(h_in, n, kout)
            inter = jnp.stack([ev, od], axis=1).reshape(2 * h_in, n, kout)
            if m + 1 < num_d:
                dst = dec_in[m + 1]
                dst[0, :, :] = jnp.zeros((n, kout), f32)
                dst[1:2 * h_in + 1, :, :] = inter
            else:
                # lane-dense x_recon: (n, H*W*C) in NHWC flatten order
                xr_ref[...] = jnp.concatenate(
                    [inter[r] for r in range(2 * h_in)], axis=-1)

    return kernel


# ---------------------------------------------------------------------------
# forward
# ---------------------------------------------------------------------------
def dscnet_forward(x, params):
    """DSCNet forward.  x: (n, C, H, W) float32  ->  (x_recon, z, z_recon)."""
    n, c0, h0, w0 = x.shape
    enc_ws, dec_ws = params["enc"], params["dec"]
    coef = params["coef"]
    s = 2
    f32, bf16 = jnp.float32, jnp.bfloat16

    # ---- static geometry ---------------------------------------------------
    enc_cfg = []
    h, w = h0, w0
    for (wgt, _b) in enc_ws:
        c_out, c_in, kh, kw = wgt.shape
        assert kh == kw
        oh, pad_t = _same_pad(h, kh, s)
        ow, pad_l = _same_pad(w, kw, s)
        enc_cfg.append(dict(cin=c_in, cout=c_out, k=kh, s=s, h_in=h, w_in=w,
                            oh=oh, ow=ow, pad_t=pad_t, pad_l=pad_l))
        h, w = oh, ow
    hh, ww, c_last = h, w, enc_ws[-1][0].shape[0]
    dz = c_last * hh * ww

    dec_cfg = []
    for (wgt, _b) in dec_ws:
        c_in, c_out, kh, kw = wgt.shape
        dec_cfg.append(dict(cin=c_in, cout=c_out, h_in=h, w_in=w))
        h, w = 2 * h, 2 * w
    h_out, w_out, c_fin = h, w, dec_ws[-1][0].shape[1]

    # rows needed by a layer's tap reads (data rows + zero pad rows)
    def in_rows(L):
        return (L["k"] - 1) + L["oh"] * L["s"]

    enc_rows = [in_rows(enc_cfg[l + 1]) if l + 1 < len(enc_cfg)
                else enc_cfg[l]["oh"] for l in range(len(enc_cfg))]

    # ---- kernel operands ---------------------------------------------------
    ops = []
    # input image -> (H, n, W*C) row slab, pre-padded for layer-0 taps, bf16
    x_slab = jnp.transpose(x.astype(f32), (2, 0, 3, 1)).reshape(h0, n, w0 * c0)
    r0, pt0 = in_rows(enc_cfg[0]), enc_cfg[0]["pad_t"]
    x_slab = jnp.pad(x_slab, ((pt0, r0 - pt0 - h0), (0, 0), (0, 0))).astype(bf16)
    ops.append(x_slab)
    for L, (wgt, b) in zip(enc_cfg, enc_ws):
        ops.append(_enc_tap_mats(wgt, L["w_in"], L["ow"], s, L["pad_l"]).astype(bf16))
        ops.append(jnp.tile(b.astype(f32), L["ow"])[None, :])
    ops.append(coef.astype(bf16))
    for L, (wgt, b) in zip(dec_cfg, dec_ws):
        ops.append(_dec_tap_mats(wgt, L["w_in"], s).astype(bf16))
        ops.append(jnp.tile(b.astype(f32), 2 * L["w_in"])[None, :])

    out_shape = (
        jax.ShapeDtypeStruct((n, h_out * w_out * c_fin), f32),   # x_recon, NHWC flat
        jax.ShapeDtypeStruct((n, dz), f32),                      # z, (h,w,c) order
        jax.ShapeDtypeStruct((n, dz), f32),                      # z_recon, (h,w,c)
    )
    scratch = [pltpu.VMEM((enc_rows[l], n, L["ow"] * L["cout"]), f32)
               for l, L in enumerate(enc_cfg)]
    scratch += [pltpu.VMEM((L["h_in"] + 1, n, L["w_in"] * L["cin"]), f32)
                for L in dec_cfg]

    cfg = dict(n=n, enc=enc_cfg, dec=dec_cfg, enc_rows=enc_rows,
               hh=hh, ww=ww, c_last=c_last)

    xr_flat, z_nat, zr_nat = pl.pallas_call(
        _make_fused_kernel(cfg),
        out_shape=out_shape,
        grid=(1,),
        in_specs=[_full_spec(o.shape) for o in ops],
        out_specs=tuple(_full_spec(o.shape) for o in out_shape),
        scratch_shapes=scratch,
        compiler_params=pltpu.CompilerParams(
            dimension_semantics=("arbitrary",),
            vmem_limit_bytes=32 * 1024 * 1024),
    )(*ops)

    # layout plumbing only (no compute): NHWC->NCHW and (h,w,c)->(c,h,w)
    x_recon = jnp.transpose(xr_flat.reshape(n, h_out, w_out, c_fin), (0, 3, 1, 2))

    def to_torch_order(t):
        return jnp.transpose(t.reshape(n, hh, ww, c_last),
                             (0, 3, 1, 2)).reshape(n, dz)

    return x_recon, to_torch_order(z_nat), to_torch_order(zr_nat)


# ---------------------------------------------------------------------------
# pure-JAX f32 reference (matches the PyTorch module semantics)
# ---------------------------------------------------------------------------
def _reference_forward(x, params):
    prec = jax.lax.Precision.HIGHEST

    def conv_same(t, w, b):
        k, s = w.shape[2], 2
        _, _, h, w_ = t.shape
        oh, ow = -(-h // s), -(-w_ // s)
        ph = max((oh - 1) * s + k - h, 0)
        pw = max((ow - 1) * s + k - w_, 0)
        t = jnp.pad(t, ((0, 0), (0, 0),
                        (ph // 2, ph - ph // 2), (pw // 2, pw - pw // 2)))
        y = jax.lax.conv_general_dilated(
            t, w, (s, s), "VALID",
            dimension_numbers=("NCHW", "OIHW", "NCHW"), precision=prec)
        return jax.nn.relu(y + b[None, :, None, None])

    def deconv_same(t, w, b):
        k, s = w.shape[2], 2
        wf = jnp.transpose(w, (1, 0, 2, 3))[:, :, ::-1, ::-1]
        y = jax.lax.conv_general_dilated(
            t, wf, (1, 1), ((k - 1, k - 1), (k - 1, k - 1)),
            lhs_dilation=(s, s),
            dimension_numbers=("NCHW", "OIHW", "NCHW"), precision=prec)
        y = y + b[None, :, None, None]
        pt = (k - s) // 2
        pw_l = (k - s) // 2
        y = y[:, :, pt:pt + s * t.shape[2], pw_l:pw_l + s * t.shape[3]]
        return jax.nn.relu(y)

    h = x
    for (w, b) in params["enc"]:
        h = conv_same(h, w, b)
    n = x.shape[0]
    z = h.reshape(n, -1)
    z_recon = jnp.matmul(params["coef"], z, precision=prec)
    y = z_recon.reshape(h.shape)
    for (w, b) in params["dec"]:
        y = deconv_same(y, w, b)
    return y, z, z_recon


# ---------------------------------------------------------------------------
# parameter init (matches the PyTorch module's parameter shapes)
# ---------------------------------------------------------------------------
def init_dscnet_params(channels, kernels, num_sample, key):
    params = {"enc": [], "dec": [], "coef": None}
    k = key
    for i in range(1, len(channels)):           # Conv2d: (c_out, c_in, kh, kw)
        k, k1, k2 = jax.random.split(k, 3)
        w = 0.1 * jax.random.normal(
            k1, (channels[i], channels[i - 1], kernels[i - 1], kernels[i - 1]),
            dtype=jnp.float32)
        b = 0.1 * jax.random.normal(k2, (channels[i],), dtype=jnp.float32)
        params["enc"].append((w, b))
    rch = list(reversed(channels))
    rke = list(reversed(kernels))
    for i in range(len(rch) - 1):               # ConvTranspose2d: (c_in, c_out, kh, kw)
        k, k1, k2 = jax.random.split(k, 3)
        w = 0.1 * jax.random.normal(
            k1, (rch[i], rch[i + 1], rke[i], rke[i]), dtype=jnp.float32)
        b = 0.1 * jax.random.normal(k2, (rch[i + 1],), dtype=jnp.float32)
        params["dec"].append((w, b))
    params["coef"] = 1e-8 * jnp.ones((num_sample, num_sample), dtype=jnp.float32)
    return params


if __name__ == "__main__":
    # small shapes consistent with the module: n=8 gray images of 16x16
    channels = [1, 4, 8]
    kernels = [3, 3]
    num_sample = 8

    key = jax.random.PRNGKey(0)
    key, kx, kp = jax.random.split(key, 3)
    x = jax.random.normal(kx, (num_sample, channels[0], 16, 16), dtype=jnp.float32)
    params = init_dscnet_params(channels, kernels, num_sample, kp)

    fwd = jax.jit(dscnet_forward)
    x_recon, z, z_recon = fwd(x, params)
    jax.block_until_ready((x_recon, z, z_recon))

    assert x_recon.shape == x.shape, x_recon.shape                  # (8, 1, 16, 16)
    assert z.shape == (num_sample, channels[-1] * 4 * 4), z.shape   # (8, 128)
    assert z_recon.shape == z.shape, z_recon.shape

    # loose tolerance: kernel feeds bf16 MXU inputs with f32 accumulation
    xr_ref, z_ref, zr_ref = _reference_forward(x, params)
    assert bool(jnp.allclose(z, z_ref, atol=5e-2, rtol=5e-2))
    assert bool(jnp.allclose(z_recon, zr_ref, atol=5e-2, rtol=5e-2))
    assert bool(jnp.allclose(x_recon, xr_ref, atol=5e-2, rtol=5e-2))

    print("KERNEL_OK")
</pallas_src>

<mosaic_0001>
module attributes {stable_mosaic.version = 11 : i64} {
  func.func @kernel(%arg0: i32, %arg1: memref<18x8x16xbf16, #tpu.memory_space<vmem>>, %arg2: memref<3x16x32xbf16, #tpu.memory_space<vmem>>, %arg3: memref<1x32xf32, #tpu.memory_space<vmem>>, %arg4: memref<3x32x32xbf16, #tpu.memory_space<vmem>>, %arg5: memref<1x32xf32, #tpu.memory_space<vmem>>, %arg6: memref<8x8xbf16, #tpu.memory_space<vmem>>, %arg7: memref<3x32x32xbf16, #tpu.memory_space<vmem>>, %arg8: memref<1x32xf32, #tpu.memory_space<vmem>>, %arg9: memref<3x32x16xbf16, #tpu.memory_space<vmem>>, %arg10: memref<1x16xf32, #tpu.memory_space<vmem>>, %arg11: memref<8x256xf32, #tpu.memory_space<vmem>>, %arg12: memref<8x128xf32, #tpu.memory_space<vmem>>, %arg13: memref<8x128xf32, #tpu.memory_space<vmem>>, %arg14: memref<10x8x32xf32, #tpu.memory_space<vmem>>, %arg15: memref<4x8x32xf32, #tpu.memory_space<vmem>>, %arg16: memref<5x8x32xf32, #tpu.memory_space<vmem>>, %arg17: memref<9x8x32xf32, #tpu.memory_space<vmem>>) attributes {dimension_semantics = [#tpu.dimension_semantics<arbitrary>], iteration_bounds = array<i64: 1>, scalar_prefetch = 0 : i64, scratch_operands = 4 : i64, tpu.core_type = #tpu.core_type<tc>, window_params = [{pipeline_mode = #tpu.pipeline_mode<synchronous>, transform_indices = @transform_0, window_bounds = array<i64: 18, 8, 16>}, {pipeline_mode = #tpu.pipeline_mode<synchronous>, transform_indices = @transform_1, window_bounds = array<i64: 3, 16, 32>}, {pipeline_mode = #tpu.pipeline_mode<synchronous>, transform_indices = @transform_2, window_bounds = array<i64: 1, 32>}, {pipeline_mode = #tpu.pipeline_mode<synchronous>, transform_indices = @transform_3, window_bounds = array<i64: 3, 32, 32>}, {pipeline_mode = #tpu.pipeline_mode<synchronous>, transform_indices = @transform_4, window_bounds = array<i64: 1, 32>}, {pipeline_mode = #tpu.pipeline_mode<synchronous>, transform_indices = @transform_5, window_bounds = array<i64: 8, 8>}, {pipeline_mode = #tpu.pipeline_mode<synchronous>, transform_indices = @transform_6, window_bounds = array<i64: 3, 32, 32>}, {pipeline_mode = #tpu.pipeline_mode<synchronous>, transform_indices = @transform_7, window_bounds = array<i64: 1, 32>}, {pipeline_mode = #tpu.pipeline_mode<synchronous>, transform_indices = @transform_8, window_bounds = array<i64: 3, 32, 16>}, {pipeline_mode = #tpu.pipeline_mode<synchronous>, transform_indices = @transform_9, window_bounds = array<i64: 1, 16>}, {pipeline_mode = #tpu.pipeline_mode<synchronous>, transform_indices = @transform_10, window_bounds = array<i64: 8, 256>}, {pipeline_mode = #tpu.pipeline_mode<synchronous>, transform_indices = @transform_11, window_bounds = array<i64: 8, 128>}, {pipeline_mode = #tpu.pipeline_mode<synchronous>, transform_indices = @transform_12, window_bounds = array<i64: 8, 128>}]} {
    %c0 = arith.constant 0 : index
    %c0_0 = arith.constant 0 : index
    %c0_1 = arith.constant 0 : index
    %0 = vector.load %arg1[%c0, %c0_0, %c0_1] : memref<18x8x16xbf16, #tpu.memory_space<vmem>>, vector<18x8x16xbf16>
    %c0_2 = arith.constant 0 : index
    %c0_3 = arith.constant 0 : index
    %1 = vector.load %arg3[%c0_2, %c0_3] : memref<1x32xf32, #tpu.memory_space<vmem>>, vector<1x32xf32>
    %cst = arith.constant 0.000000e+00 : f32
    %2 = vector.broadcast %cst : f32 to vector<64x32xf32>
    %3 = vector.extract_strided_slice %0 {offsets = [0, 0, 0], sizes = [16, 8, 16], strides = [1, 1, 1]} : vector<18x8x16xbf16> to vector<16x8x16xbf16>
    %4 = vector.shape_cast %3 : vector<16x8x16xbf16> to vector<8x2x8x16xbf16>
    %5 = vector.extract_strided_slice %4 {offsets = [0, 0, 0, 0], sizes = [8, 1, 8, 16], strides = [1, 1, 1, 1]} : vector<8x2x8x16xbf16> to vector<8x1x8x16xbf16>
    %6 = vector.shape_cast %5 : vector<8x1x8x16xbf16> to vector<8x8x16xbf16>
    %7 = vector.shape_cast %6 : vector<8x8x16xbf16> to vector<64x16xbf16>
    %c0_4 = arith.constant 0 : index
    %c0_5 = arith.constant 0 : index
    %c0_6 = arith.constant 0 : index
    %8 = vector.load %arg2[%c0_4, %c0_5, %c0_6] : memref<3x16x32xbf16, #tpu.memory_space<vmem>>, vector<1x16x32xbf16>
    %9 = vector.shape_cast %8 : vector<1x16x32xbf16> to vector<16x32xbf16>
    %cst_7 = arith.constant dense<0.000000e+00> : vector<64x32xf32>
    %10 = tpu.matmul %7, %9, %cst_7 {dimension_numbers = #tpu.dot_dimension_numbers<[1], [0], [0], [1], [0, 0, 1, 1], [], []>} : vector<64x16xbf16>, vector<16x32xbf16>, vector<64x32xf32> -> vector<64x32xf32>
    %11 = arith.addf %2, %10 : vector<64x32xf32>
    %12 = vector.extract_strided_slice %0 {offsets = [1, 0, 0], sizes = [16, 8, 16], strides = [1, 1, 1]} : vector<18x8x16xbf16> to vector<16x8x16xbf16>
    %13 = vector.shape_cast %12 : vector<16x8x16xbf16> to vector<8x2x8x16xbf16>
    %14 = vector.extract_strided_slice %13 {offsets = [0, 0, 0, 0], sizes = [8, 1, 8, 16], strides = [1, 1, 1, 1]} : vector<8x2x8x16xbf16> to vector<8x1x8x16xbf16>
    %15 = vector.shape_cast %14 : vector<8x1x8x16xbf16> to vector<8x8x16xbf16>
    %16 = vector.shape_cast %15 : vector<8x8x16xbf16> to vector<64x16xbf16>
    %c1 = arith.constant 1 : index
    %c0_8 = arith.constant 0 : index
    %c0_9 = arith.constant 0 : index
    %17 = vector.load %arg2[%c1, %c0_8, %c0_9] : memref<3x16x32xbf16, #tpu.memory_space<vmem>>, vector<1x16x32xbf16>
    %18 = vector.shape_cast %17 : vector<1x16x32xbf16> to vector<16x32xbf16>
    %cst_10 = arith.constant dense<0.000000e+00> : vector<64x32xf32>
    %19 = tpu.matmul %16, %18, %cst_10 {dimension_numbers = #tpu.dot_dimension_numbers<[1], [0], [0], [1], [0, 0, 1, 1], [], []>} : vector<64x16xbf16>, vector<16x32xbf16>, vector<64x32xf32> -> vector<64x32xf32>
    %20 = arith.addf %11, %19 : vector<64x32xf32>
    %21 = vector.extract_strided_slice %0 {offsets = [2, 0, 0], sizes = [16, 8, 16], strides = [1, 1, 1]} : vector<18x8x16xbf16> to vector<16x8x16xbf16>
    %22 = vector.shape_cast %21 : vector<16x8x16xbf16> to vector<8x2x8x16xbf16>
    %23 = vector.extract_strided_slice %22 {offsets = [0, 0, 0, 0], sizes = [8, 1, 8, 16], strides = [1, 1, 1, 1]} : vector<8x2x8x16xbf16> to vector<8x1x8x16xbf16>
    %24 = vector.shape_cast %23 : vector<8x1x8x16xbf16> to vector<8x8x16xbf16>
    %25 = vector.shape_cast %24 : vector<8x8x16xbf16> to vector<64x16xbf16>
    %c2 = arith.constant 2 : index
    %c0_11 = arith.constant 0 : index
    %c0_12 = arith.constant 0 : index
    %26 = vector.load %arg2[%c2, %c0_11, %c0_12] : memref<3x16x32xbf16, #tpu.memory_space<vmem>>, vector<1x16x32xbf16>
    %27 = vector.shape_cast %26 : vector<1x16x32xbf16> to vector<16x32xbf16>
    %cst_13 = arith.constant dense<0.000000e+00> : vector<64x32xf32>
    %28 = tpu.matmul %25, %27, %cst_13 {dimension_numbers = #tpu.dot_dimension_numbers<[1], [0], [0], [1], [0, 0, 1, 1], [], []>} : vector<64x16xbf16>, vector<16x32xbf16>, vector<64x32xf32> -> vector<64x32xf32>
    %29 = arith.addf %20, %28 : vector<64x32xf32>
    %30 = vector.broadcast %1 : vector<1x32xf32> to vector<64x32xf32>
    %31 = arith.addf %29, %30 : vector<64x32xf32>
    %cst_14 = arith.constant 0.000000e+00 : f32
    %32 = vector.broadcast %cst_14 : f32 to vector<64x32xf32>
    %33 = arith.maximumf %31, %32 : vector<64x32xf32>
    %34 = vector.shape_cast %33 : vector<64x32xf32> to vector<8x8x32xf32>
    %c0_15 = arith.constant 0 : index
    %c0_16 = arith.constant 0 : index
    %c0_17 = arith.constant 0 : index
    %35 = vector.load %arg14[%c0_15, %c0_16, %c0_17] : memref<10x8x32xf32, #tpu.memory_space<vmem>>, vector<8x8x32xf32>
    tpu.vector_store %arg14[%c0_15, %c0_16, %c0_17], %34 {strides = array<i32>} : memref<10x8x32xf32, #tpu.memory_space<vmem>>, vector<8x8x32xf32>,
    %cst_18 = arith.constant 0.000000e+00 : f32
    %36 = vector.broadcast %cst_18 : f32 to vector<2x8x32xf32>
    %c8 = arith.constant 8 : index
    %c0_19 = arith.constant 0 : index
    %c0_20 = arith.constant 0 : index
    %37 = vector.load %arg14[%c8, %c0_19, %c0_20] : memref<10x8x32xf32, #tpu.memory_space<vmem>>, vector<2x8x32xf32>
    tpu.vector_store %arg14[%c8, %c0_19, %c0_20], %36 {strides = array<i32>} : memref<10x8x32xf32, #tpu.memory_space<vmem>>, vector<2x8x32xf32>,
    %c0_21 = arith.constant 0 : index
    %c0_22 = arith.constant 0 : index
    %c0_23 = arith.constant 0 : index
    %38 = vector.load %arg14[%c0_21, %c0_22, %c0_23] : memref<10x8x32xf32, #tpu.memory_space<vmem>>, vector<10x8x32xf32>
    %39 = arith.truncf %38 : vector<10x8x32xf32> to vector<10x8x32xbf16>
    %c0_24 = arith.constant 0 : index
    %c0_25 = arith.constant 0 : index
    %40 = vector.load %arg5[%c0_24, %c0_25] : memref<1x32xf32, #tpu.memory_space<vmem>>, vector<1x32xf32>
    %cst_26 = arith.constant 0.000000e+00 : f32
    %41 = vector.broadcast %cst_26 : f32 to vector<32x32xf32>
    %42 = vector.extract_strided_slice %39 {offsets = [0, 0, 0], sizes = [8, 8, 32], strides = [1, 1, 1]} : vector<10x8x32xbf16> to vector<8x8x32xbf16>
    %43 = vector.shape_cast %42 : vector<8x8x32xbf16> to vector<4x2x8x32xbf16>
    %44 = vector.extract_strided_slice %43 {offsets = [0, 0, 0, 0], sizes = [4, 1, 8, 32], strides = [1, 1, 1, 1]} : vector<4x2x8x32xbf16> to vector<4x1x8x32xbf16>
    %45 = vector.shape_cast %44 : vector<4x1x8x32xbf16> to vector<4x8x32xbf16>
    %46 = vector.shape_cast %45 : vector<4x8x32xbf16> to vector<32x32xbf16>
    %c0_27 = arith.constant 0 : index
    %c0_28 = arith.constant 0 : index
    %c0_29 = arith.constant 0 : index
    %47 = vector.load %arg4[%c0_27, %c0_28, %c0_29] : memref<3x32x32xbf16, #tpu.memory_space<vmem>>, vector<1x32x32xbf16>
    %48 = vector.shape_cast %47 : vector<1x32x32xbf16> to vector<32x32xbf16>
    %cst_30 = arith.constant dense<0.000000e+00> : vector<32x32xf32>
    %49 = tpu.matmul %46, %48, %cst_30 {dimension_numbers = #tpu.dot_dimension_numbers<[1], [0], [0], [1], [0, 0, 1, 1], [], []>} : vector<32x32xbf16>, vector<32x32xbf16>, vector<32x32xf32> -> vector<32x32xf32>
    %50 = arith.addf %41, %49 : vector<32x32xf32>
    %51 = vector.extract_strided_slice %39 {offsets = [1, 0, 0], sizes = [8, 8, 32], strides = [1, 1, 1]} : vector<10x8x32xbf16> to vector<8x8x32xbf16>
    %52 = vector.shape_cast %51 : vector<8x8x32xbf16> to vector<4x2x8x32xbf16>
    %53 = vector.extract_strided_slice %52 {offsets = [0, 0, 0, 0], sizes = [4, 1, 8, 32], strides = [1, 1, 1, 1]} : vector<4x2x8x32xbf16> to vector<4x1x8x32xbf16>
    %54 = vector.shape_cast %53 : vector<4x1x8x32xbf16> to vector<4x8x32xbf16>
    %55 = vector.shape_cast %54 : vector<4x8x32xbf16> to vector<32x32xbf16>
    %c1_31 = arith.constant 1 : index
    %c0_32 = arith.constant 0 : index
    %c0_33 = arith.constant 0 : index
    %56 = vector.load %arg4[%c1_31, %c0_32, %c0_33] : memref<3x32x32xbf16, #tpu.memory_space<vmem>>, vector<1x32x32xbf16>
    %57 = vector.shape_cast %56 : vector<1x32x32xbf16> to vector<32x32xbf16>
    %cst_34 = arith.constant dense<0.000000e+00> : vector<32x32xf32>
    %58 = tpu.matmul %55, %57, %cst_34 {dimension_numbers = #tpu.dot_dimension_numbers<[1], [0], [0], [1], [0, 0, 1, 1], [], []>} : vector<32x32xbf16>, vector<32x32xbf16>, vector<32x32xf32> -> vector<32x32xf32>
    %59 = arith.addf %50, %58 : vector<32x32xf32>
    %60 = vector.extract_strided_slice %39 {offsets = [2, 0, 0], sizes = [8, 8, 32], strides = [1, 1, 1]} : vector<10x8x32xbf16> to vector<8x8x32xbf16>
    %61 = vector.shape_cast %60 : vector<8x8x32xbf16> to vector<4x2x8x32xbf16>
    %62 = vector.extract_strided_slice %61 {offsets = [0, 0, 0, 0], sizes = [4, 1, 8, 32], strides = [1, 1, 1, 1]} : vector<4x2x8x32xbf16> to vector<4x1x8x32xbf16>
    %63 = vector.shape_cast %62 : vector<4x1x8x32xbf16> to vector<4x8x32xbf16>
    %64 = vector.shape_cast %63 : vector<4x8x32xbf16> to vector<32x32xbf16>
    %c2_35 = arith.constant 2 : index
    %c0_36 = arith.constant 0 : index
    %c0_37 = arith.constant 0 : index
    %65 = vector.load %arg4[%c2_35, %c0_36, %c0_37] : memref<3x32x32xbf16, #tpu.memory_space<vmem>>, vector<1x32x32xbf16>
    %66 = vector.shape_cast %65 : vector<1x32x32xbf16> to vector<32x32xbf16>
    %cst_38 = arith.constant dense<0.000000e+00> : vector<32x32xf32>
    %67 = tpu.matmul %64, %66, %cst_38 {dimension_numbers = #tpu.dot_dimension_numbers<[1], [0], [0], [1], [0, 0, 1, 1], [], []>} : vector<32x32xbf16>, vector<32x32xbf16>, vector<32x32xf32> -> vector<32x32xf32>
    %68 = arith.addf %59, %67 : vector<32x32xf32>
    %69 = vector.broadcast %40 : vector<1x32xf32> to vector<32x32xf32>
    %70 = arith.addf %68, %69 : vector<32x32xf32>
    %cst_39 = arith.constant 0.000000e+00 : f32
    %71 = vector.broadcast %cst_39 : f32 to vector<32x32xf32>
    %72 = arith.maximumf %70, %71 : vector<32x32xf32>
    %73 = vector.shape_cast %72 : vector<32x32xf32> to vector<4x8x32xf32>
    %c0_40 = arith.constant 0 : index
    %c0_41 = arith.constant 0 : index
    %c0_42 = arith.constant 0 : index
    %74 = vector.load %arg15[%c0_40, %c0_41, %c0_42] : memref<4x8x32xf32, #tpu.memory_space<vmem>>, vector<4x8x32xf32>
    tpu.vector_store %arg15[%c0_40, %c0_41, %c0_42], %73 {strides = array<i32>} : memref<4x8x32xf32, #tpu.memory_space<vmem>>, vector<4x8x32xf32>,
    %c0_43 = arith.constant 0 : index
    %c0_44 = arith.constant 0 : index
    %c0_45 = arith.constant 0 : index
    %75 = vector.load %arg15[%c0_43, %c0_44, %c0_45] : memref<4x8x32xf32, #tpu.memory_space<vmem>>, vector<1x8x32xf32>
    %76 = vector.shape_cast %75 : vector<1x8x32xf32> to vector<8x32xf32>
    %c1_46 = arith.constant 1 : index
    %c0_47 = arith.constant 0 : index
    %c0_48 = arith.constant 0 : index
    %77 = vector.load %arg15[%c1_46, %c0_47, %c0_48] : memref<4x8x32xf32, #tpu.memory_space<vmem>>, vector<1x8x32xf32>
    %78 = vector.shape_cast %77 : vector<1x8x32xf32> to vector<8x32xf32>
    %c2_49 = arith.constant 2 : index
    %c0_50 = arith.constant 0 : index
    %c0_51 = arith.constant 0 : index
    %79 = vector.load %arg15[%c2_49, %c0_50, %c0_51] : memref<4x8x32xf32, #tpu.memory_space<vmem>>, vector<1x8x32xf32>
    %80 = vector.shape_cast %79 : vector<1x8x32xf32> to vector<8x32xf32>
    %c3 = arith.constant 3 : index
    %c0_52 = arith.constant 0 : index
    %c0_53 = arith.constant 0 : index
    %81 = vector.load %arg15[%c3, %c0_52, %c0_53] : memref<4x8x32xf32, #tpu.memory_space<vmem>>, vector<1x8x32xf32>
    %82 = vector.shape_cast %81 : vector<1x8x32xf32> to vector<8x32xf32>
    %83 = tpu.concatenate %76, %78, %80, %82 in 1 : vector<8x32xf32>, vector<8x32xf32>, vector<8x32xf32>, vector<8x32xf32> -> vector<8x128xf32>
    %c0_54 = arith.constant 0 : index
    %c0_55 = arith.constant 0 : index
    %84 = vector.load %arg12[%c0_54, %c0_55] : memref<8x128xf32, #tpu.memory_space<vmem>>, vector<8x128xf32>
    tpu.vector_store %arg12[%c0_54, %c0_55], %83 {strides = array<i32>} : memref<8x128xf32, #tpu.memory_space<vmem>>, vector<8x128xf32>,
    %c0_56 = arith.constant 0 : index
    %c0_57 = arith.constant 0 : index
    %85 = vector.load %arg6[%c0_56, %c0_57] : memref<8x8xbf16, #tpu.memory_space<vmem>>, vector<8x8xbf16>
    %86 = arith.truncf %83 : vector<8x128xf32> to vector<8x128xbf16>
    %cst_58 = arith.constant dense<0.000000e+00> : vector<8x128xf32>
    %87 = tpu.matmul %85, %86, %cst_58 {dimension_numbers = #tpu.dot_dimension_numbers<[1], [0], [0], [1], [0, 0, 1, 1], [], []>} : vector<8x8xbf16>, vector<8x128xbf16>, vector<8x128xf32> -> vector<8x128xf32>
    %c0_59 = arith.constant 0 : index
    %c0_60 = arith.constant 0 : index
    %88 = vector.load %arg13[%c0_59, %c0_60] : memref<8x128xf32, #tpu.memory_space<vmem>>, vector<8x128xf32>
    tpu.vector_store %arg13[%c0_59, %c0_60], %87 {strides = array<i32>} : memref<8x128xf32, #tpu.memory_space<vmem>>, vector<8x128xf32>,
    %cst_61 = arith.constant 0.000000e+00 : f32
    %89 = vector.broadcast %cst_61 : f32 to vector<8x32xf32>
    %c0_62 = arith.constant 0 : index
    %c0_63 = arith.constant 0 : index
    %c0_64 = arith.constant 0 : index
    %90 = vector.load %arg16[%c0_62, %c0_63, %c0_64] : memref<5x8x32xf32, #tpu.memory_space<vmem>>, vector<1x8x32xf32>
    %91 = vector.shape_cast %90 : vector<1x8x32xf32> to vector<8x32xf32>
    %92 = vector.shape_cast %89 : vector<8x32xf32> to vector<1x8x32xf32>
    tpu.vector_store %arg16[%c0_62, %c0_63, %c0_64], %92 {strides = array<i32>} : memref<5x8x32xf32, #tpu.memory_space<vmem>>, vector<1x8x32xf32>,
    %93 = vector.extract_strided_slice %87 {offsets = [0, 0], sizes = [8, 32], strides = [1, 1]} : vector<8x128xf32> to vector<8x32xf32>
    %c1_65 = arith.constant 1 : index
    %c0_66 = arith.constant 0 : index
    %c0_67 = arith.constant 0 : index
    %94 = vector.load %arg16[%c1_65, %c0_66, %c0_67] : memref<5x8x32xf32, #tpu.memory_space<vmem>>, vector<1x8x32xf32>
    %95 = vector.shape_cast %94 : vector<1x8x32xf32> to vector<8x32xf32>
    %96 = vector.shape_cast %93 : vector<8x32xf32> to vector<1x8x32xf32>
    tpu.vector_store %arg16[%c1_65, %c0_66, %c0_67], %96 {strides = array<i32>} : memref<5x8x32xf32, #tpu.memory_space<vmem>>, vector<1x8x32xf32>,
    %97 = vector.extract_strided_slice %87 {offsets = [0, 32], sizes = [8, 32], strides = [1, 1]} : vector<8x128xf32> to vector<8x32xf32>
    %c2_68 = arith.constant 2 : index
    %c0_69 = arith.constant 0 : index
    %c0_70 = arith.constant 0 : index
    %98 = vector.load %arg16[%c2_68, %c0_69, %c0_70] : memref<5x8x32xf32, #tpu.memory_space<vmem>>, vector<1x8x32xf32>
    %99 = vector.shape_cast %98 : vector<1x8x32xf32> to vector<8x32xf32>
    %100 = vector.shape_cast %97 : vector<8x32xf32> to vector<1x8x32xf32>
    tpu.vector_store %arg16[%c2_68, %c0_69, %c0_70], %100 {strides = array<i32>} : memref<5x8x32xf32, #tpu.memory_space<vmem>>, vector<1x8x32xf32>,
    %101 = vector.extract_strided_slice %87 {offsets = [0, 64], sizes = [8, 32], strides = [1, 1]} : vector<8x128xf32> to vector<8x32xf32>
    %c3_71 = arith.constant 3 : index
    %c0_72 = arith.constant 0 : index
    %c0_73 = arith.constant 0 : index
    %102 = vector.load %arg16[%c3_71, %c0_72, %c0_73] : memref<5x8x32xf32, #tpu.memory_space<vmem>>, vector<1x8x32xf32>
    %103 = vector.shape_cast %102 : vector<1x8x32xf32> to vector<8x32xf32>
    %104 = vector.shape_cast %101 : vector<8x32xf32> to vector<1x8x32xf32>
    tpu.vector_store %arg16[%c3_71, %c0_72, %c0_73], %104 {strides = array<i32>} : memref<5x8x32xf32, #tpu.memory_space<vmem>>, vector<1x8x32xf32>,
    %105 = vector.extract_strided_slice %87 {offsets = [0, 96], sizes = [8, 32], strides = [1, 1]} : vector<8x128xf32> to vector<8x32xf32>
    %c4 = arith.constant 4 : index
    %c0_74 = arith.constant 0 : index
    %c0_75 = arith.constant 0 : index
    %106 = vector.load %arg16[%c4, %c0_74, %c0_75] : memref<5x8x32xf32, #tpu.memory_space<vmem>>, vector<1x8x32xf32>
    %107 = vector.shape_cast %106 : vector<1x8x32xf32> to vector<8x32xf32>
    %108 = vector.shape_cast %105 : vector<8x32xf32> to vector<1x8x32xf32>
    tpu.vector_store %arg16[%c4, %c0_74, %c0_75], %108 {strides = array<i32>} : memref<5x8x32xf32, #tpu.memory_space<vmem>>, vector<1x8x32xf32>,
    %c0_76 = arith.constant 0 : index
    %c0_77 = arith.constant 0 : index
    %c0_78 = arith.constant 0 : index
    %109 = vector.load %arg16[%c0_76, %c0_77, %c0_78] : memref<5x8x32xf32, #tpu.memory_space<vmem>>, vector<5x8x32xf32>
    %110 = arith.truncf %109 : vector<5x8x32xf32> to vector<5x8x32xbf16>
    %111 = vector.extract_strided_slice %110 {offsets = [1, 0, 0], sizes = [4, 8, 32], strides = [1, 1, 1]} : vector<5x8x32xbf16> to vector<4x8x32xbf16>
    %112 = vector.shape_cast %111 : vector<4x8x32xbf16> to vector<32x32xbf16>
    %113 = vector.extract_strided_slice %110 {offsets = [0, 0, 0], sizes = [4, 8, 32], strides = [1, 1, 1]} : vector<5x8x32xbf16> to vector<4x8x32xbf16>
    %114 = vector.shape_cast %113 : vector<4x8x32xbf16> to vector<32x32xbf16>
    %c0_79 = arith.constant 0 : index
    %c0_80 = arith.constant 0 : index
    %115 = vector.load %arg8[%c0_79, %c0_80] : memref<1x32xf32, #tpu.memory_space<vmem>>, vector<1x32xf32>
    %c0_81 = arith.constant 0 : index
    %c0_82 = arith.constant 0 : index
    %c0_83 = arith.constant 0 : index
    %116 = vector.load %arg7[%c0_81, %c0_82, %c0_83] : memref<3x32x32xbf16, #tpu.memory_space<vmem>>, vector<1x32x32xbf16>
    %117 = vector.shape_cast %116 : vector<1x32x32xbf16> to vector<32x32xbf16>
    %cst_84 = arith.constant dense<0.000000e+00> : vector<32x32xf32>
    %118 = tpu.matmul %112, %117, %cst_84 {dimension_numbers = #tpu.dot_dimension_numbers<[1], [0], [0], [1], [0, 0, 1, 1], [], []>} : vector<32x32xbf16>, vector<32x32xbf16>, vector<32x32xf32> -> vector<32x32xf32>
    %c1_85 = arith.constant 1 : index
    %c0_86 = arith.constant 0 : index
    %c0_87 = arith.constant 0 : index
    %119 = vector.load %arg7[%c1_85, %c0_86, %c0_87] : memref<3x32x32xbf16, #tpu.memory_space<vmem>>, vector<1x32x32xbf16>
    %120 = vector.shape_cast %119 : vector<1x32x32xbf16> to vector<32x32xbf16>
    %cst_88 = arith.constant dense<0.000000e+00> : vector<32x32xf32>
    %121 = tpu.matmul %114, %120, %cst_88 {dimension_numbers = #tpu.dot_dimension_numbers<[1], [0], [0], [1], [0, 0, 1, 1], [], []>} : vector<32x32xbf16>, vector<32x32xbf16>, vector<32x32xf32> -> vector<32x32xf32>
    %122 = arith.addf %118, %121 : vector<32x32xf32>
    %123 = vector.broadcast %115 : vector<1x32xf32> to vector<32x32xf32>
    %124 = arith.addf %122, %123 : vector<32x32xf32>
    %c2_89 = arith.constant 2 : index
    %c0_90 = arith.constant 0 : index
    %c0_91 = arith.constant 0 : index
    %125 = vector.load %arg7[%c2_89, %c0_90, %c0_91] : memref<3x32x32xbf16, #tpu.memory_space<vmem>>, vector<1x32x32xbf16>
    %126 = vector.shape_cast %125 : vector<1x32x32xbf16> to vector<32x32xbf16>
    %cst_92 = arith.constant dense<0.000000e+00> : vector<32x32xf32>
    %127 = tpu.matmul %112, %126, %cst_92 {dimension_numbers = #tpu.dot_dimension_numbers<[1], [0], [0], [1], [0, 0, 1, 1], [], []>} : vector<32x32xbf16>, vector<32x32xbf16>, vector<32x32xf32> -> vector<32x32xf32>
    %128 = vector.broadcast %115 : vector<1x32xf32> to vector<32x32xf32>
    %129 = arith.addf %127, %128 : vector<32x32xf32>
    %cst_93 = arith.constant 0.000000e+00 : f32
    %130 = vector.broadcast %cst_93 : f32 to vector<32x32xf32>
    %131 = arith.maximumf %124, %130 : vector<32x32xf32>
    %132 = vector.shape_cast %131 : vector<32x32xf32> to vector<4x8x32xf32>
    %cst_94 = arith.constant 0.000000e+00 : f32
    %133 = vector.broadcast %cst_94 : f32 to vector<32x32xf32>
    %134 = arith.maximumf %129, %133 : vector<32x32xf32>
    %135 = vector.shape_cast %134 : vector<32x32xf32> to vector<4x8x32xf32>
    %136 = vector.shape_cast %132 : vector<4x8x32xf32> to vector<4x1x8x32xf32>
    %137 = vector.shape_cast %135 : vector<4x8x32xf32> to vector<4x1x8x32xf32>
    %138 = tpu.concatenate %136, %137 in 1 : vector<4x1x8x32xf32>, vector<4x1x8x32xf32> -> vector<4x2x8x32xf32>
    %139 = vector.shape_cast %138 : vector<4x2x8x32xf32> to vector<8x8x32xf32>
    %cst_95 = arith.constant 0.000000e+00 : f32
    %140 = vector.broadcast %cst_95 : f32 to vector<8x32xf32>
    %c0_96 = arith.constant 0 : index
    %c0_97 = arith.constant 0 : index
    %c0_98 = arith.constant 0 : index
    %141 = vector.load %arg17[%c0_96, %c0_97, %c0_98] : memref<9x8x32xf32, #tpu.memory_space<vmem>>, vector<1x8x32xf32>
    %142 = vector.shape_cast %141 : vector<1x8x32xf32> to vector<8x32xf32>
    %143 = vector.shape_cast %140 : vector<8x32xf32> to vector<1x8x32xf32>
    tpu.vector_store %arg17[%c0_96, %c0_97, %c0_98], %143 {strides = array<i32>} : memref<9x8x32xf32, #tpu.memory_space<vmem>>, vector<1x8x32xf32>,
    %c1_99 = arith.constant 1 : index
    %c0_100 = arith.constant 0 : index
    %c0_101 = arith.constant 0 : index
    %144 = vector.load %arg17[%c1_99, %c0_100, %c0_101] : memref<9x8x32xf32, #tpu.memory_space<vmem>>, vector<8x8x32xf32>
    tpu.vector_store %arg17[%c1_99, %c0_100, %c0_101], %139 {strides = array<i32>} : memref<9x8x32xf32, #tpu.memory_space<vmem>>, vector<8x8x32xf32>,
    %c0_102 = arith.constant 0 : index
    %c0_103 = arith.constant 0 : index
    %c0_104 = arith.constant 0 : index
    %145 = vector.load %arg17[%c0_102, %c0_103, %c0_104] : memref<9x8x32xf32, #tpu.memory_space<vmem>>, vector<9x8x32xf32>
    %146 = arith.truncf %145 : vector<9x8x32xf32> to vector<9x8x32xbf16>
    %147 = vector.extract_strided_slice %146 {offsets = [1, 0, 0], sizes = [8, 8, 32], strides = [1, 1, 1]} : vector<9x8x32xbf16> to vector<8x8x32xbf16>
    %148 = vector.shape_cast %147 : vector<8x8x32xbf16> to vector<64x32xbf16>
    %149 = vector.extract_strided_slice %146 {offsets = [0, 0, 0], sizes = [8, 8, 32], strides = [1, 1, 1]} : vector<9x8x32xbf16> to vector<8x8x32xbf16>
    %150 = vector.shape_cast %149 : vector<8x8x32xbf16> to vector<64x32xbf16>
    %c0_105 = arith.constant 0 : index
    %c0_106 = arith.constant 0 : index
    %151 = vector.load %arg10[%c0_105, %c0_106] : memref<1x16xf32, #tpu.memory_space<vmem>>, vector<1x16xf32>
    %c0_107 = arith.constant 0 : index
    %c0_108 = arith.constant 0 : index
    %c0_109 = arith.constant 0 : index
    %152 = vector.load %arg9[%c0_107, %c0_108, %c0_109] : memref<3x32x16xbf16, #tpu.memory_space<vmem>>, vector<1x32x16xbf16>
    %153 = vector.shape_cast %152 : vector<1x32x16xbf16> to vector<32x16xbf16>
    %cst_110 = arith.constant dense<0.000000e+00> : vector<64x16xf32>
    %154 = tpu.matmul %148, %153, %cst_110 {dimension_numbers = #tpu.dot_dimension_numbers<[1], [0], [0], [1], [0, 0, 1, 1], [], []>} : vector<64x32xbf16>, vector<32x16xbf16>, vector<64x16xf32> -> vector<64x16xf32>
    %c1_111 = arith.constant 1 : index
    %c0_112 = arith.constant 0 : index
    %c0_113 = arith.constant 0 : index
    %155 = vector.load %arg9[%c1_111, %c0_112, %c0_113] : memref<3x32x16xbf16, #tpu.memory_space<vmem>>, vector<1x32x16xbf16>
    %156 = vector.shape_cast %155 : vector<1x32x16xbf16> to vector<32x16xbf16>
    %cst_114 = arith.constant dense<0.000000e+00> : vector<64x16xf32>
    %157 = tpu.matmul %150, %156, %cst_114 {dimension_numbers = #tpu.dot_dimension_numbers<[1], [0], [0], [1], [0, 0, 1, 1], [], []>} : vector<64x32xbf16>, vector<32x16xbf16>, vector<64x16xf32> -> vector<64x16xf32>
    %158 = arith.addf %154, %157 : vector<64x16xf32>
    %159 = vector.broadcast %151 : vector<1x16xf32> to vector<64x16xf32>
    %160 = arith.addf %158, %159 : vector<64x16xf32>
    %c2_115 = arith.constant 2 : index
    %c0_116 = arith.constant 0 : index
    %c0_117 = arith.constant 0 : index
    %161 = vector.load %arg9[%c2_115, %c0_116, %c0_117] : memref<3x32x16xbf16, #tpu.memory_space<vmem>>, vector<1x32x16xbf16>
    %162 = vector.shape_cast %161 : vector<1x32x16xbf16> to vector<32x16xbf16>
    %cst_118 = arith.constant dense<0.000000e+00> : vector<64x16xf32>
    %163 = tpu.matmul %148, %162, %cst_118 {dimension_numbers = #tpu.dot_dimension_numbers<[1], [0], [0], [1], [0, 0, 1, 1], [], []>} : vector<64x32xbf16>, vector<32x16xbf16>, vector<64x16xf32> -> vector<64x16xf32>
    %164 = vector.broadcast %151 : vector<1x16xf32> to vector<64x16xf32>
    %165 = arith.addf %163, %164 : vector<64x16xf32>
    %cst_119 = arith.constant 0.000000e+00 : f32
    %166 = vector.broadcast %cst_119 : f32 to vector<64x16xf32>
    %167 = arith.maximumf %160, %166 : vector<64x16xf32>
    %168 = vector.shape_cast %167 : vector<64x16xf32> to vector<8x8x16xf32>
    %cst_120 = arith.constant 0.000000e+00 : f32
    %169 = vector.broadcast %cst_120 : f32 to vector<64x16xf32>
    %170 = arith.maximumf %165, %169 : vector<64x16xf32>
    %171 = vector.shape_cast %170 : vector<64x16xf32> to vector<8x8x16xf32>
    %172 = vector.shape_cast %168 : vector<8x8x16xf32> to vector<8x1x8x16xf32>
    %173 = vector.shape_cast %171 : vector<8x8x16xf32> to vector<8x1x8x16xf32>
    %174 = tpu.concatenate %172, %173 in 1 : vector<8x1x8x16xf32>, vector<8x1x8x16xf32> -> vector<8x2x8x16xf32>
    %175 = vector.shape_cast %174 : vector<8x2x8x16xf32> to vector<16x8x16xf32>
    %176 = vector.extract_strided_slice %175 {offsets = [0, 0, 0], sizes = [1, 8, 16], strides = [1, 1, 1]} : vector<16x8x16xf32> to vector<1x8x16xf32>
    %177 = vector.shape_cast %176 : vector<1x8x16xf32> to vector<8x16xf32>
    %178 = vector.extract_strided_slice %175 {offsets = [1, 0, 0], sizes = [1, 8, 16], strides = [1, 1, 1]} : vector<16x8x16xf32> to vector<1x8x16xf32>
    %179 = vector.shape_cast %178 : vector<1x8x16xf32> to vector<8x16xf32>
    %180 = vector.extract_strided_slice %175 {offsets = [2, 0, 0], sizes = [1, 8, 16], strides = [1, 1, 1]} : vector<16x8x16xf32> to vector<1x8x16xf32>
    %181 = vector.shape_cast %180 : vector<1x8x16xf32> to vector<8x16xf32>
    %182 = vector.extract_strided_slice %175 {offsets = [3, 0, 0], sizes = [1, 8, 16], strides = [1, 1, 1]} : vector<16x8x16xf32> to vector<1x8x16xf32>
    %183 = vector.shape_cast %182 : vector<1x8x16xf32> to vector<8x16xf32>
    %184 = vector.extract_strided_slice %175 {offsets = [4, 0, 0], sizes = [1, 8, 16], strides = [1, 1, 1]} : vector<16x8x16xf32> to vector<1x8x16xf32>
    %185 = vector.shape_cast %184 : vector<1x8x16xf32> to vector<8x16xf32>
    %186 = vector.extract_strided_slice %175 {offsets = [5, 0, 0], sizes = [1, 8, 16], strides = [1, 1, 1]} : vector<16x8x16xf32> to vector<1x8x16xf32>
    %187 = vector.shape_cast %186 : vector<1x8x16xf32> to vector<8x16xf32>
    %188 = vector.extract_strided_slice %175 {offsets = [6, 0, 0], sizes = [1, 8, 16], strides = [1, 1, 1]} : vector<16x8x16xf32> to vector<1x8x16xf32>
    %189 = vector.shape_cast %188 : vector<1x8x16xf32> to vector<8x16xf32>
    %190 = vector.extract_strided_slice %175 {offsets = [7, 0, 0], sizes = [1, 8, 16], strides = [1, 1, 1]} : vector<16x8x16xf32> to vector<1x8x16xf32>
    %191 = vector.shape_cast %190 : vector<1x8x16xf32> to vector<8x16xf32>
    %192 = vector.extract_strided_slice %175 {offsets = [8, 0, 0], sizes = [1, 8, 16], strides = [1, 1, 1]} : vector<16x8x16xf32> to vector<1x8x16xf32>
    %193 = vector.shape_cast %192 : vector<1x8x16xf32> to vector<8x16xf32>
    %194 = vector.extract_strided_slice %175 {offsets = [9, 0, 0], sizes = [1, 8, 16], strides = [1, 1, 1]} : vector<16x8x16xf32> to vector<1x8x16xf32>
    %195 = vector.shape_cast %194 : vector<1x8x16xf32> to vector<8x16xf32>
    %196 = vector.extract_strided_slice %175 {offsets = [10, 0, 0], sizes = [1, 8, 16], strides = [1, 1, 1]} : vector<16x8x16xf32> to vector<1x8x16xf32>
    %197 = vector.shape_cast %196 : vector<1x8x16xf32> to vector<8x16xf32>
    %198 = vector.extract_strided_slice %175 {offsets = [11, 0, 0], sizes = [1, 8, 16], strides = [1, 1, 1]} : vector<16x8x16xf32> to vector<1x8x16xf32>
    %199 = vector.shape_cast %198 : vector<1x8x16xf32> to vector<8x16xf32>
    %200 = vector.extract_strided_slice %175 {offsets = [12, 0, 0], sizes = [1, 8, 16], strides = [1, 1, 1]} : vector<16x8x16xf32> to vector<1x8x16xf32>
    %201 = vector.shape_cast %200 : vector<1x8x16xf32> to vector<8x16xf32>
    %202 = vector.extract_strided_slice %175 {offsets = [13, 0, 0], sizes = [1, 8, 16], strides = [1, 1, 1]} : vector<16x8x16xf32> to vector<1x8x16xf32>
    %203 = vector.shape_cast %202 : vector<1x8x16xf32> to vector<8x16xf32>
    %204 = vector.extract_strided_slice %175 {offsets = [14, 0, 0], sizes = [1, 8, 16], strides = [1, 1, 1]} : vector<16x8x16xf32> to vector<1x8x16xf32>
    %205 = vector.shape_cast %204 : vector<1x8x16xf32> to vector<8x16xf32>
    %206 = vector.extract_strided_slice %175 {offsets = [15, 0, 0], sizes = [1, 8, 16], strides = [1, 1, 1]} : vector<16x8x16xf32> to vector<1x8x16xf32>
    %207 = vector.shape_cast %206 : vector<1x8x16xf32> to vector<8x16xf32>
    %208 = tpu.concatenate %177, %179, %181, %183, %185, %187, %189, %191, %193, %195, %197, %199, %201, %203, %205, %207 in 1 : vector<8x16xf32>, vector<8x16xf32>, vector<8x16xf32>, vector<8x16xf32>, vector<8x16xf32>, vector<8x16xf32>, vector<8x16xf32>, vector<8x16xf32>, vector<8x16xf32>, vector<8x16xf32>, vector<8x16xf32>, vector<8x16xf32>, vector<8x16xf32>, vector<8x16xf32>, vector<8x16xf32>, vector<8x16xf32> -> vector<8x256xf32>
    %c0_121 = arith.constant 0 : index
    %c0_122 = arith.constant 0 : index
    %209 = vector.load %arg11[%c0_121, %c0_122] : memref<8x256xf32, #tpu.memory_space<vmem>>, vector<8x256xf32>
    tpu.vector_store %arg11[%c0_121, %c0_122], %208 {strides = array<i32>} : memref<8x256xf32, #tpu.memory_space<vmem>>, vector<8x256xf32>,
    return
  }
  func.func @transform_0(%arg0: i32) -> (i32, i32, i32) {
    %c0_i32 = arith.constant 0 : i32
    %c0_i32_0 = arith.constant 0 : i32
    %c0_i32_1 = arith.constant 0 : i32
    %c0_i32_2 = arith.constant 0 : i32
    return %c0_i32, %c0_i32_0, %c0_i32_1 : i32, i32, i32
  }
  func.func @transform_1(%arg0: i32) -> (i32, i32, i32) {
    %c0_i32 = arith.constant 0 : i32
    %c0_i32_0 = arith.constant 0 : i32
    %c0_i32_1 = arith.constant 0 : i32
    %c0_i32_2 = arith.constant 0 : i32
    return %c0_i32, %c0_i32_0, %c0_i32_1 : i32, i32, i32
  }
  func.func @transform_2(%arg0: i32) -> (i32, i32) {
    %c0_i32 = arith.constant 0 : i32
    %c0_i32_0 = arith.constant 0 : i32
    %c0_i32_1 = arith.constant 0 : i32
    return %c0_i32, %c0_i32_0 : i32, i32
  }
  func.func @transform_3(%arg0: i32) -> (i32, i32, i32) {
    %c0_i32 = arith.constant 0 : i32
    %c0_i32_0 = arith.constant 0 : i32
    %c0_i32_1 = arith.constant 0 : i32
    %c0_i32_2 = arith.constant 0 : i32
    return %c0_i32, %c0_i32_0, %c0_i32_1 : i32, i32, i32
  }
  func.func @transform_4(%arg0: i32) -> (i32, i32) {
    %c0_i32 = arith.constant 0 : i32
    %c0_i32_0 = arith.constant 0 : i32
    %c0_i32_1 = arith.constant 0 : i32
    return %c0_i32, %c0_i32_0 : i32, i32
  }
  func.func @transform_5(%arg0: i32) -> (i32, i32) {
    %c0_i32 = arith.constant 0 : i32
    %c0_i32_0 = arith.constant 0 : i32
    %c0_i32_1 = arith.constant 0 : i32
    return %c0_i32, %c0_i32_0 : i32, i32
  }
  func.func @transform_6(%arg0: i32) -> (i32, i32, i32) {
    %c0_i32 = arith.constant 0 : i32
    %c0_i32_0 = arith.constant 0 : i32
    %c0_i32_1 = arith.constant 0 : i32
    %c0_i32_2 = arith.constant 0 : i32
    return %c0_i32, %c0_i32_0, %c0_i32_1 : i32, i32, i32
  }
  func.func @transform_7(%arg0: i32) -> (i32, i32) {
    %c0_i32 = arith.constant 0 : i32
    %c0_i32_0 = arith.constant 0 : i32
    %c0_i32_1 = arith.constant 0 : i32
    return %c0_i32, %c0_i32_0 : i32, i32
  }
  func.func @transform_8(%arg0: i32) -> (i32, i32, i32) {
    %c0_i32 = arith.constant 0 : i32
    %c0_i32_0 = arith.constant 0 : i32
    %c0_i32_1 = arith.constant 0 : i32
    %c0_i32_2 = arith.constant 0 : i32
    return %c0_i32, %c0_i32_0, %c0_i32_1 : i32, i32, i32
  }
  func.func @transform_9(%arg0: i32) -> (i32, i32) {
    %c0_i32 = arith.constant 0 : i32
    %c0_i32_0 = arith.constant 0 : i32
    %c0_i32_1 = arith.constant 0 : i32
    return %c0_i32, %c0_i32_0 : i32, i32
  }
  func.func @transform_10(%arg0: i32) -> (i32, i32) {
    %c0_i32 = arith.constant 0 : i32
    %c0_i32_0 = arith.constant 0 : i32
    %c0_i32_1 = arith.constant 0 : i32
    return %c0_i32, %c0_i32_0 : i32, i32
  }
  func.func @transform_11(%arg0: i32) -> (i32, i32) {
    %c0_i32 = arith.constant 0 : i32
    %c0_i32_0 = arith.constant 0 : i32
    %c0_i32_1 = arith.constant 0 : i32
    return %c0_i32, %c0_i32_0 : i32, i32
  }
  func.func @transform_12(%arg0: i32) -> (i32, i32) {
    %c0_i32 = arith.constant 0 : i32
    %c0_i32_0 = arith.constant 0 : i32
    %c0_i32_1 = arith.constant 0 : i32
    return %c0_i32, %c0_i32_0 : i32, i32
  }
}

</mosaic_0001>

<llo_original>
// kernel: tile.23
$region0: #{tile.23}
  #allocation0 [shape = 's32[1]{0}', space=sflag, size = 0x4, scoped, tag = 'scoped memory for tile.23']
  %s0 = inlined_call_operand.vmem [shape: f32[4], index: 0, kind: input, shape index: {}]
  %s1 = inlined_call_operand.vmem [shape: f32[8,4], index: 1, kind: output, shape index: {}]
  // Predicated region
  $region2: #{tile.23} parent=0 // pred_check
    _
  $region3: #{tile.23} parent=0 // pred_check_branch
    %3 = sbr.rel (0) target = $region5
  $region4: #{tile.23} parent=0 // pred_region
    _
  $region5: #{tile.23} parent=0 // pred_fallthru
    _
  %v4 = vld [vmem:[%s0] ss:$0 sm:$0xff]
  %5 = vst [vmem:[%s1] sm:$0xff] %v4

// kernel: tile.24
$region0: #{tile.24}
  %s0 = inlined_call_operand.vmem [shape: f32[8,4], index: 0, kind: input, shape index: {}]
  %s1 = inlined_call_operand.vmem [shape: f32[1,32], index: 1, kind: output, shape index: {}]
  $region1: #{tile.24} parent=0
    #allocation0 [shape = 'u8[4096]{0}', space=vmem, size = 0x1000, scoped, tag = 'scoped mem for output reshape']
    %v2 = vld [vmem:[%s0] sm:$0x1]
    %vm3 = vcmask 31744
    %4 = vst.msk [vmem:[#allocation0] sm:$0x1] %vm3, %v2
    %s5 = scalar_lea.vmem %s0, 7
    %v6 = vld [vmem:[%s5] sm:$0x1]
    %7 = vrot.lane.b32.xlu0 %v6, 28
    %v8 = vpop.permute.xlu0 %7
    %vm9 = vcmask 261344
    %10 = vst.msk [vmem:[#allocation0] sm:$0x1] %vm9, %v8
    %s11 = scalar_lea.vmem %s0, 6
    %v12 = vld [vmem:[%s11] sm:$0x1]
    %13 = vrot.lane.b32.xlu0 %v12, 24
    %v14 = vpop.permute.xlu0 %13
    %vm15 = vcmask 228544
    %16 = vst.msk [vmem:[#allocation0] sm:$0x1] %vm15, %v14
    %s17 = scalar_lea.vmem %s0, 5
    %v18 = vld [vmem:[%s17] sm:$0x1]
    %19 = vrot.lane.b32.xlu0 %v18, 20
    %v20 = vpop.permute.xlu0 %19
    %vm21 = vcmask 195744
    %22 = vst.msk [vmem:[#allocation0] sm:$0x1] %vm21, %v20
    %s23 = scalar_lea.vmem %s0, 4
    %v24 = vld [vmem:[%s23] sm:$0x1]
    %25 = vrot.lane.b32.xlu0 %v24, 16
    %v26 = vpop.permute.xlu0 %25
    %vm27 = vcmask 162944
    %28 = vst.msk [vmem:[#allocation0] sm:$0x1] %vm27, %v26
    %s29 = scalar_lea.vmem %s0, 3
    %v30 = vld [vmem:[%s29] sm:$0x1]
    %31 = vrot.lane.b32.xlu0 %v30, 12
    %v32 = vpop.permute.xlu0 %31
    %vm33 = vcmask 130144
    %34 = vst.msk [vmem:[#allocation0] sm:$0x1] %vm33, %v32
    %s35 = scalar_lea.vmem %s0, 2
    %v36 = vld [vmem:[%s35] sm:$0x1]
    %37 = vrot.lane.b32.xlu0 %v36, 8
    %v38 = vpop.permute.xlu0 %37
    %vm39 = vcmask 97344
    %40 = vst.msk [vmem:[#allocation0] sm:$0x1] %vm39, %v38
    %s41 = scalar_lea.vmem %s0, 1
    %v42 = vld [vmem:[%s41] sm:$0x1]
    %43 = vrot.lane.b32.xlu0 %v42, 4
    %v44 = vpop.permute.xlu0 %43
    %vm45 = vcmask 64544
    %46 = vst.msk [vmem:[#allocation0] sm:$0x1] %vm45, %v44
    %s48 = ssub.s32 2, 1
    %v49 = vld [vmem:[#allocation0] sm:%s48]
    %s51 = ssub.s32 2, 1
    %52 = vst [vmem:[%s1] sm:%s51] %v49

// kernel: tile.28
$region0: #{tile.28}
  #allocation0 [shape = 's32[1]{0}', space=sflag, size = 0x4, scoped, tag = 'scoped memory for tile.28']
  %s0 = inlined_call_operand.vmem [shape: f32[8], index: 0, kind: input, shape index: {}]
  %s1 = inlined_call_operand.vmem [shape: f32[4,8], index: 1, kind: output, shape index: {}]
  // Predicated region
  $region2: #{tile.28} parent=0 // pred_check
    _
  $region3: #{tile.28} parent=0 // pred_check_branch
    %3 = sbr.rel (0) target = $region5
  $region4: #{tile.28} parent=0 // pred_region
    _
  $region5: #{tile.28} parent=0 // pred_fallthru
    _
  %v4 = vld [vmem:[%s0] ss:$0 sm:$0xff]
  %5 = vst [vmem:[%s1] sm:$0xf] %v4

// kernel: tile.29
$region0: #{tile.29}
  %s0 = inlined_call_operand.vmem [shape: f32[4,8], index: 0, kind: input, shape index: {}]
  %s1 = inlined_call_operand.vmem [shape: f32[1,32], index: 1, kind: output, shape index: {}]
  $region1: #{tile.29} parent=0
    #allocation0 [shape = 'u8[4096]{0}', space=vmem, size = 0x1000, scoped, tag = 'scoped mem for output reshape']
    #allocation1 [shape = 'u8[4096]{0}', space=vmem, size = 0x1000, scoped, tag = 'scoped mem for input reshape']
    %s3 = ssub.s32 16, 1
    %v4 = vld [vmem:[%s0] sm:%s3]
    %5 = vst [vmem:[#allocation1] sm:%s3] %v4
    %v6 = vld [vmem:[#allocation1] sm:$0x1]
    %vm7 = vcmask 64512
    %8 = vst.msk [vmem:[#allocation0] sm:$0x1] %vm7, %v6
    %s9 = scalar_lea.vmem [#allocation1], 3
    %v10 = vld [vmem:[%s9] sm:$0x1]
    %11 = vrot.lane.b32.xlu0 %v10, 24
    %v12 = vpop.permute.xlu0 %11
    %vm13 = vcmask 261312
    %14 = vst.msk [vmem:[#allocation0] sm:$0x1] %vm13, %v12
    %s15 = scalar_lea.vmem [#allocation1], 2
    %v16 = vld [vmem:[%s15] sm:$0x1]
    %17 = vrot.lane.b32.xlu0 %v16, 16
    %v18 = vpop.permute.xlu0 %17
    %vm19 = vcmask 195712
    %20 = vst.msk [vmem:[#allocation0] sm:$0x1] %vm19, %v18
    %s21 = scalar_lea.vmem [#allocation1], 1
    %v22 = vld [vmem:[%s21] sm:$0x1]
    %23 = vrot.lane.b32.xlu0 %v22, 8
    %v24 = vpop.permute.xlu0 %23
    %vm25 = vcmask 130112
    %26 = vst.msk [vmem:[#allocation0] sm:$0x1] %vm25, %v24
    %s28 = ssub.s32 2, 1
    %v29 = vld [vmem:[#allocation0] sm:%s28]
    %s31 = ssub.s32 2, 1
    %32 = vst [vmem:[%s1] sm:%s31] %v29

// kernel: dscnet_forward.1
$region0: #{dscnet_forward.1}
  #allocation0 [shape = 'u32[]', space=smem, size = 0x4, offset = 0x4, fixed_abs, tag = 'smem constant byte address 0x4 - core index']
  #allocation1 [shape = 'u32[72,128]{1,0:T(1,128)}', space=vmem, size = 0x9000, scoped, tag = 'internal scratch']
  #allocation2 [shape = 'f32[10,8,32]{2,1,0:T(8,128)}', space=vmem, size = 0xa000, scoped, tag = 'scratch operand']
  #allocation3 [shape = 'f32[4,8,32]{2,1,0:T(8,128)}', space=vmem, size = 0x4000, scoped, tag = 'scratch operand']
  #allocation4 [shape = 'f32[5,8,32]{2,1,0:T(8,128)}', space=vmem, size = 0x5000, scoped, tag = 'scratch operand']
  #allocation5 [shape = 'f32[9,8,32]{2,1,0:T(8,128)}', space=vmem, size = 0x9000, scoped, tag = 'scratch operand']
  %s0 = inlined_call_operand.vmem [shape: bf16[18,8,16], index: 0, kind: input, shape index: {}]
  %s1 = inlined_call_operand.vmem [shape: bf16[3,16,32], index: 1, kind: input, shape index: {}]
  %s2 = inlined_call_operand.vmem [shape: f32[1,32], index: 2, kind: input, shape index: {}]
  %s3 = inlined_call_operand.vmem [shape: bf16[3,32,32], index: 3, kind: input, shape index: {}]
  %s4 = inlined_call_operand.vmem [shape: f32[1,32], index: 4, kind: input, shape index: {}]
  %s5 = inlined_call_operand.vmem [shape: bf16[8,8], index: 5, kind: input, shape index: {}]
  %s6 = inlined_call_operand.vmem [shape: bf16[3,32,32], index: 6, kind: input, shape index: {}]
  %s7 = inlined_call_operand.vmem [shape: f32[1,32], index: 7, kind: input, shape index: {}]
  %s8 = inlined_call_operand.vmem [shape: bf16[3,32,16], index: 8, kind: input, shape index: {}]
  %s9 = inlined_call_operand.vmem [shape: f32[1,16], index: 9, kind: input, shape index: {}]
  %s10 = inlined_call_operand.vmem [shape: f32[8,256], index: 10, kind: output, shape index: {0}]
  %s11 = inlined_call_operand.vmem [shape: f32[8,128], index: 11, kind: output, shape index: {1}]
  %s12 = inlined_call_operand.vmem [shape: f32[8,128], index: 12, kind: output, shape index: {2}]
  %13 = xla_tuple %s10, %s11, %s12
  %s14 = sld [smem:[#allocation0]]
  $region66: #{dscnet_forward.1} parent=0
    _
  %s16 = ssub.s32 1, %s14
  %s17 = scalar_select 0, %s16, %s14
  // Predicated region
  $region2: #{dscnet_forward.1} parent=0 // pred_check
    _
  $region3: #{dscnet_forward.1} parent=0 // pred_check_branch
    %19 = sbr.rel (0) target = $region5
  $region4: #{dscnet_forward.1} parent=0 // pred_region
    _
  $region5: #{dscnet_forward.1} parent=0 // pred_fallthru
    _
  // Predicated region
  $region6: #{dscnet_forward.1} parent=0 // pred_check
    _
  $region7: #{dscnet_forward.1} parent=0 // pred_check_branch
    %21 = sbr.rel (0) target = $region9
  $region8: #{dscnet_forward.1} parent=0 // pred_region
    _
  $region9: #{dscnet_forward.1} parent=0 // pred_fallthru
    _
  // Predicated region
  $region10: #{dscnet_forward.1} parent=0 // pred_check
    _
  $region11: #{dscnet_forward.1} parent=0 // pred_check_branch
    %23 = sbr.rel (0) target = $region13
  $region12: #{dscnet_forward.1} parent=0 // pred_region
    _
  $region13: #{dscnet_forward.1} parent=0 // pred_fallthru
    _
  // Predicated region
  $region14: #{dscnet_forward.1} parent=0 // pred_check
    _
  $region15: #{dscnet_forward.1} parent=0 // pred_check_branch
    %25 = sbr.rel (0) target = $region17
  $region16: #{dscnet_forward.1} parent=0 // pred_region
    _
  $region17: #{dscnet_forward.1} parent=0 // pred_fallthru
    _
  // Predicated region
  $region18: #{dscnet_forward.1} parent=0 // pred_check
    _
  $region19: #{dscnet_forward.1} parent=0 // pred_check_branch
    %27 = sbr.rel (0) target = $region21
  $region20: #{dscnet_forward.1} parent=0 // pred_region
    _
  $region21: #{dscnet_forward.1} parent=0 // pred_fallthru
    _
  // Predicated region
  $region22: #{dscnet_forward.1} parent=0 // pred_check
    _
  $region23: #{dscnet_forward.1} parent=0 // pred_check_branch
    %29 = sbr.rel (0) target = $region25
  $region24: #{dscnet_forward.1} parent=0 // pred_region
    _
  $region25: #{dscnet_forward.1} parent=0 // pred_fallthru
    _
  // Predicated region
  $region26: #{dscnet_forward.1} parent=0 // pred_check
    _
  $region27: #{dscnet_forward.1} parent=0 // pred_check_branch
    %31 = sbr.rel (0) target = $region29
  $region28: #{dscnet_forward.1} parent=0 // pred_region
    _
  $region29: #{dscnet_forward.1} parent=0 // pred_fallthru
    _
  // Predicated region
  $region30: #{dscnet_forward.1} parent=0 // pred_check
    _
  $region31: #{dscnet_forward.1} parent=0 // pred_check_branch
    %33 = sbr.rel (0) target = $region33
  $region32: #{dscnet_forward.1} parent=0 // pred_region
    _
  $region33: #{dscnet_forward.1} parent=0 // pred_fallthru
    _
  // Predicated region
  $region34: #{dscnet_forward.1} parent=0 // pred_check
    _
  $region35: #{dscnet_forward.1} parent=0 // pred_check_branch
    %35 = sbr.rel (0) target = $region37
  $region36: #{dscnet_forward.1} parent=0 // pred_region
    _
  $region37: #{dscnet_forward.1} parent=0 // pred_fallthru
    _
  // Predicated region
  $region38: #{dscnet_forward.1} parent=0 // pred_check
    _
  $region39: #{dscnet_forward.1} parent=0 // pred_check_branch
    %37 = sbr.rel (0) target = $region41
  $region40: #{dscnet_forward.1} parent=0 // pred_region
    _
  $region41: #{dscnet_forward.1} parent=0 // pred_fallthru
    _
  %v39 = vld [vmem:[%s0] sm:$0xf]
  %v40 = vld [vmem:[%s0 + $0x4] sm:$0xf]
  %v41 = vld [vmem:[%s0 + $0x8] sm:$0xf]
  %v42 = vld [vmem:[%s0 + $0xc] sm:$0xf]
  %v43 = vld [vmem:[%s0 + $0x10] sm:$0xf]
  %v44 = vld [vmem:[%s0 + $0x14] sm:$0xf]
  %v45 = vld [vmem:[%s0 + $0x18] sm:$0xf]
  %v46 = vld [vmem:[%s0 + $0x1c] sm:$0xf]
  %v47 = vld [vmem:[%s0 + $0x20] sm:$0xf]
  %v48 = vld [vmem:[%s0 + $0x24] sm:$0xf]
  %v49 = vld [vmem:[%s0 + $0x28] sm:$0xf]
  %v50 = vld [vmem:[%s0 + $0x2c] sm:$0xf]
  %v51 = vld [vmem:[%s0 + $0x30] sm:$0xf]
  %v52 = vld [vmem:[%s0 + $0x34] sm:$0xf]
  %v53 = vld [vmem:[%s0 + $0x38] sm:$0xf]
  %v54 = vld [vmem:[%s0 + $0x3c] sm:$0xf]
  %v55 = vld [vmem:[%s0 + $0x40] sm:$0xf]
  %v56 = vld [vmem:[%s2] sm:$0x1]
  %v57 = vld [vmem:[%s1] sm:$0xf]
  %v58 = vld [vmem:[%s1 + $0x4] sm:$0xf]
  %s59 = scalar_lea.vmem %s1, 8
  %v60 = vld [vmem:[%s59] sm:$0xf]
  %v61 = vld [vmem:[%s59 + $0x4] sm:$0xf]
  %v70 = vunpack.c.l.b16 %v40
  %v71 = vunpack.c.l.b16 %v42
  %v72 = vunpack.c.l.b16 %v44
  %v73 = vunpack.c.l.b16 %v46
  %v74 = vunpack.c.l.b16 %v48
  %v75 = vunpack.c.l.b16 %v50
  %v76 = vunpack.c.l.b16 %v52
  %v77 = vunpack.c.l.b16 %v54
  %v78 = vpack.c.b16 %v71, %v70
  %v79 = vpack.c.b16 %v73, %v72
  %v80 = vpack.c.b16 %v75, %v74
  %v81 = vpack.c.b16 %v77, %v76
  %v84 = vunpack.c.l.b16 %v60
  %v85 = vunpack.c.l.b16 %v61
  %v86 = vpack.c.b16 %v85, %v84
  %vm88 = vcmask 130048
  %v90 = vsel %vm88, %v78, 0
  %v93 = vsel %vm88, %v79, 0
  %v96 = vsel %vm88, %v80, 0
  %v99 = vsel %vm88, %v81, 0
  %101 = vmatpush.bf16.msra.mxu0 0
  %102 = vmatpush.bf16.msra.mxu0 0
  %103 = vmatpush.bf16.msra.mxu0 0
  %104 = vmatpush.bf16.msra.mxu0 0
  %105 = vmatpush.bf16.msra.mxu0 0
  %106 = vmatpush.bf16.msra.mxu0 0
  %107 = vmatpush.bf16.msra.mxu0 0
  %108 = vmatpush.bf16.msra.mxu0 %v86
  %109 = vmatmul.bf16.gmra.mxu0 %v90
  %v110 = vpop.f32.mrf.mxu0
  %v111 = vadd.f32 0.0, %v110
  %v112 = vpop.f32.mrf.mxu0
  %v113 = vadd.f32 0.0, %v112
  %114 = vmatmul.bf16.gmra.mxu0 %v93
  %v115 = vpop.f32.mrf.mxu0
  %v116 = vadd.f32 0.0, %v115
  %v117 = vpop.f32.mrf.mxu0
  %v118 = vadd.f32 0.0, %v117
  %119 = vmatmul.bf16.gmra.mxu0 %v96
  %v120 = vpop.f32.mrf.mxu0
  %v121 = vadd.f32 0.0, %v120
  %v122 = vpop.f32.mrf.mxu0
  %v123 = vadd.f32 0.0, %v122
  %124 = vmatmul.bf16.gmra.mxu0 %v99
  %v125 = vpop.f32.mrf.mxu0
  %v126 = vadd.f32 0.0, %v125
  %v127 = vpop.f32.mrf.mxu0
  %v128 = vadd.f32 0.0, %v127
  %129 = vdwg.mxu0
  %v138 = vunpack.c.l.b16 %v39
  %v139 = vunpack.c.l.b16 %v41
  %v140 = vunpack.c.l.b16 %v43
  %v141 = vunpack.c.l.b16 %v45
  %v142 = vunpack.c.l.b16 %v47
  %v143 = vunpack.c.l.b16 %v49
  %v144 = vunpack.c.l.b16 %v51
  %v145 = vunpack.c.l.b16 %v53
  %v146 = vpack.c.b16 %v139, %v138
  %v147 = vpack.c.b16 %v141, %v140
  %v148 = vpack.c.b16 %v143, %v142
  %v149 = vpack.c.b16 %v145, %v144
  %v152 = vunpack.c.l.b16 %v57
  %v153 = vunpack.c.l.b16 %v58
  %v154 = vpack.c.b16 %v153, %v152
  %v157 = vsel %vm88, %v146, 0
  %v160 = vsel %vm88, %v147, 0
  %v163 = vsel %vm88, %v148, 0
  %v166 = vsel %vm88, %v149, 0
  %168 = vmatpush.bf16.msra.mxu0 0
  %169 = vmatpush.bf16.msra.mxu0 0
  %170 = vmatpush.bf16.msra.mxu0 0
  %171 = vmatpush.bf16.msra.mxu0 0
  %172 = vmatpush.bf16.msra.mxu0 0
  %173 = vmatpush.bf16.msra.mxu0 0
  %174 = vmatpush.bf16.msra.mxu0 0
  %175 = vmatpush.bf16.msra.mxu0 %v154
  %176 = vmatmul.bf16.gmra.mxu0 %v157
  %v177 = vpop.f32.mrf.mxu0
  %v178 = vadd.f32 %v111, %v177
  %v179 = vpop.f32.mrf.mxu0
  %v180 = vadd.f32 %v113, %v179
  %181 = vmatmul.bf16.gmra.mxu0 %v160
  %v182 = vpop.f32.mrf.mxu0
  %v183 = vadd.f32 %v116, %v182
  %v184 = vpop.f32.mrf.mxu0
  %v185 = vadd.f32 %v118, %v184
  %186 = vmatmul.bf16.gmra.mxu0 %v163
  %v187 = vpop.f32.mrf.mxu0
  %v188 = vadd.f32 %v121, %v187
  %v189 = vpop.f32.mrf.mxu0
  %v190 = vadd.f32 %v123, %v189
  %191 = vmatmul.bf16.gmra.mxu0 %v166
  %v192 = vpop.f32.mrf.mxu0
  %v193 = vadd.f32 %v126, %v192
  %v194 = vpop.f32.mrf.mxu0
  %v195 = vadd.f32 %v128, %v194
  %196 = vdwg.mxu0
  %s197 = scalar_lea.vmem %s1, 16
  %v198 = vld [vmem:[%s197] sm:$0xf]
  %v199 = vld [vmem:[%s197 + $0x4] sm:$0xf]
  %v201 = vunpack.c.l.b16 %v55
  %v202 = vpack.c.b16 %v140, %v139
  %v203 = vpack.c.b16 %v142, %v141
  %v204 = vpack.c.b16 %v144, %v143
  %v205 = vpack.c.b16 %v201, %v145
  %v208 = vunpack.c.l.b16 %v198
  %v209 = vunpack.c.l.b16 %v199
  %v210 = vpack.c.b16 %v209, %v208
  %v213 = vsel %vm88, %v202, 0
  %v216 = vsel %vm88, %v203, 0
  %v219 = vsel %vm88, %v204, 0
  %v222 = vsel %vm88, %v205, 0
  %224 = vmatpush.bf16.msra.mxu0 0
  %225 = vmatpush.bf16.msra.mxu0 0
  %226 = vmatpush.bf16.msra.mxu0 0
  %227 = vmatpush.bf16.msra.mxu0 0
  %228 = vmatpush.bf16.msra.mxu0 0
  %229 = vmatpush.bf16.msra.mxu0 0
  %230 = vmatpush.bf16.msra.mxu0 0
  %231 = vmatpush.bf16.msra.mxu0 %v210
  %232 = vmatmul.bf16.gmra.mxu0 %v213
  %v233 = vpop.f32.mrf.mxu0
  %v234 = vadd.f32 0.0, %v233
  %v235 = vpop.f32.mrf.mxu0
  %v236 = vadd.f32 0.0, %v235
  %237 = vmatmul.bf16.gmra.mxu0 %v216
  %v238 = vpop.f32.mrf.mxu0
  %v239 = vadd.f32 0.0, %v238
  %v240 = vpop.f32.mrf.mxu0
  %v241 = vadd.f32 0.0, %v240
  %242 = vmatmul.bf16.gmra.mxu0 %v219
  %v243 = vpop.f32.mrf.mxu0
  %v244 = vadd.f32 0.0, %v243
  %v245 = vpop.f32.mrf.mxu0
  %v246 = vadd.f32 0.0, %v245
  %247 = vmatmul.bf16.gmra.mxu0 %v222
  %v248 = vpop.f32.mrf.mxu0
  %v249 = vadd.f32 0.0, %v248
  %v250 = vpop.f32.mrf.mxu0
  %v251 = vadd.f32 0.0, %v250
  %252 = vdwg.mxu0
  %v253 = vadd.f32 %v178, %v234
  %v254 = vadd.f32 %v180, %v236
  %v255 = vadd.f32 %v183, %v239
  %v256 = vadd.f32 %v185, %v241
  %v257 = vadd.f32 %v188, %v244
  %v258 = vadd.f32 %v190, %v246
  %v259 = vadd.f32 %v193, %v249
  %v260 = vadd.f32 %v195, %v251
  %v262 = vperm.slane %v56, 0
  %v264 = vadd.f32 %v253, %v262
  %v265 = vadd.f32 %v254, %v262
  %v266 = vadd.f32 %v255, %v262
  %v267 = vadd.f32 %v256, %v262
  %v268 = vadd.f32 %v257, %v262
  %v269 = vadd.f32 %v258, %v262
  %v270 = vadd.f32 %v259, %v262
  %v271 = vadd.f32 %v260, %v262
  %v272 = vmax.f32 %v264, 0.0
  %v273 = vmax.f32 %v265, 0.0
  %v274 = vmax.f32 %v266, 0.0
  %v275 = vmax.f32 %v267, 0.0
  %v276 = vmax.f32 %v268, 0.0
  %v277 = vmax.f32 %v269, 0.0
  %v278 = vmax.f32 %v270, 0.0
  %v279 = vmax.f32 %v271, 0.0
  %vm280 = vcmask 261120
  %281 = vst.msk [vmem:[#allocation2] sm:$0xff] %vm280, %v272
  %282 = vst.msk [vmem:[#allocation2 + $0x8] sm:$0xff] %vm280, %v273
  %283 = vst.msk [vmem:[#allocation2 + $0x10] sm:$0xff] %vm280, %v274
  %284 = vst.msk [vmem:[#allocation2 + $0x18] sm:$0xff] %vm280, %v275
  %285 = vst.msk [vmem:[#allocation2 + $0x20] sm:$0xff] %vm280, %v276
  %286 = vst.msk [vmem:[#allocation2 + $0x28] sm:$0xff] %vm280, %v277
  %287 = vst.msk [vmem:[#allocation2 + $0x30] sm:$0xff] %vm280, %v278
  %288 = vst.msk [vmem:[#allocation2 + $0x38] sm:$0xff] %vm280, %v279
  %s289 = scalar_lea.vmem [#allocation2], 64
  %290 = vst.msk [vmem:[%s289] sm:$0xff] %vm280, 0.0
  %291 = vst.msk [vmem:[%s289 + $0x8] sm:$0xff] %vm280, 0.0
  %v292 = vld [vmem:[#allocation2] sm:$0xff]
  %v293 = vld [vmem:[#allocation2 + $0x8] sm:$0xff]
  %v294 = vld [vmem:[#allocation2 + $0x10] sm:$0xff]
  %v295 = vld [vmem:[#allocation2 + $0x18] sm:$0xff]
  %v296 = vld [vmem:[#allocation2 + $0x20] sm:$0xff]
  %v297 = vld [vmem:[#allocation2 + $0x28] sm:$0xff]
  %v298 = vld [vmem:[#allocation2 + $0x30] sm:$0xff]
  %v299 = vld [vmem:[#allocation2 + $0x38] sm:$0xff]
  %v300 = vld [vmem:[#allocation2 + $0x40] sm:$0xff]
  %v301 = vpack.c.bf16 %v292, %v292
  %v302 = vpack.c.bf16 %v293, %v293
  %v303 = vpack.c.bf16 %v294, %v294
  %v304 = vpack.c.bf16 %v295, %v295
  %v305 = vpack.c.bf16 %v296, %v296
  %v306 = vpack.c.bf16 %v297, %v297
  %v307 = vpack.c.bf16 %v298, %v298
  %v308 = vpack.c.bf16 %v299, %v299
  %v309 = vpack.c.bf16 %v300, %v300
  %v310 = vld [vmem:[%s4] sm:$0x1]
  %v311 = vld [vmem:[%s3] sm:$0xf]
  %v312 = vld [vmem:[%s3 + $0x4] sm:$0xf]
  %v313 = vld [vmem:[%s3 + $0x8] sm:$0xf]
  %v314 = vld [vmem:[%s3 + $0xc] sm:$0xf]
  %s315 = scalar_lea.vmem %s3, 16
  %v316 = vld [vmem:[%s315] sm:$0xf]
  %v317 = vld [vmem:[%s315 + $0x4] sm:$0xf]
  %v318 = vld [vmem:[%s315 + $0x8] sm:$0xf]
  %v319 = vld [vmem:[%s315 + $0xc] sm:$0xf]
  %v324 = vunpack.c.l.b16 %v302
  %v325 = vunpack.c.l.b16 %v304
  %v326 = vunpack.c.l.b16 %v306
  %v327 = vunpack.c.l.b16 %v308
  %v328 = vpack.c.b16 %v325, %v324
  %v329 = vpack.c.b16 %v327, %v326
  %v334 = vunpack.c.l.b16 %v316
  %v335 = vunpack.c.l.b16 %v317
  %v336 = vunpack.c.l.b16 %v318
  %v337 = vunpack.c.l.b16 %v319
  %v338 = vpack.c.b16 %v335, %v334
  %v339 = vpack.c.b16 %v337, %v336
  %v343 = vsel %vm280, %v328, 0
  %v346 = vsel %vm280, %v329, 0
  %348 = vmatpush.bf16.msra.mxu0 0
  %349 = vmatpush.bf16.msra.mxu0 0
  %350 = vmatpush.bf16.msra.mxu0 0
  %351 = vmatpush.bf16.msra.mxu0 0
  %352 = vmatpush.bf16.msra.mxu0 0
  %353 = vmatpush.bf16.msra.mxu0 0
  %354 = vmatpush.bf16.msra.mxu0 %v339
  %355 = vmatpush.bf16.msra.mxu0 %v338
  %356 = vmatmul.bf16.gmra.mxu0 %v343
  %v357 = vpop.f32.mrf.mxu0
  %v358 = vadd.f32 0.0, %v357
  %v359 = vpop.f32.mrf.mxu0
  %v360 = vadd.f32 0.0, %v359
  %361 = vmatmul.bf16.gmra.mxu0 %v346
  %v362 = vpop.f32.mrf.mxu0
  %v363 = vadd.f32 0.0, %v362
  %v364 = vpop.f32.mrf.mxu0
  %v365 = vadd.f32 0.0, %v364
  %366 = vdwg.mxu0
  %v371 = vunpack.c.l.b16 %v301
  %v372 = vunpack.c.l.b16 %v303
  %v373 = vunpack.c.l.b16 %v305
  %v374 = vunpack.c.l.b16 %v307
  %v375 = vpack.c.b16 %v372, %v371
  %v376 = vpack.c.b16 %v374, %v373
  %v381 = vunpack.c.l.b16 %v311
  %v382 = vunpack.c.l.b16 %v312
  %v383 = vunpack.c.l.b16 %v313
  %v384 = vunpack.c.l.b16 %v314
  %v385 = vpack.c.b16 %v382, %v381
  %v386 = vpack.c.b16 %v384, %v383
  %v390 = vsel %vm280, %v375, 0
  %v393 = vsel %vm280, %v376, 0
  %395 = vmatpush.bf16.msra.mxu0 0
  %396 = vmatpush.bf16.msra.mxu0 0
  %397 = vmatpush.bf16.msra.mxu0 0
  %398 = vmatpush.bf16.msra.mxu0 0
  %399 = vmatpush.bf16.msra.mxu0 0
  %400 = vmatpush.bf16.msra.mxu0 0
  %401 = vmatpush.bf16.msra.mxu0 %v386
  %402 = vmatpush.bf16.msra.mxu0 %v385
  %403 = vmatmul.bf16.gmra.mxu0 %v390
  %v404 = vpop.f32.mrf.mxu0
  %v405 = vadd.f32 %v358, %v404
  %v406 = vpop.f32.mrf.mxu0
  %v407 = vadd.f32 %v360, %v406
  %408 = vmatmul.bf16.gmra.mxu0 %v393
  %v409 = vpop.f32.mrf.mxu0
  %v410 = vadd.f32 %v363, %v409
  %v411 = vpop.f32.mrf.mxu0
  %v412 = vadd.f32 %v365, %v411
  %413 = vdwg.mxu0
  %s414 = scalar_lea.vmem %s3, 32
  %v415 = vld [vmem:[%s414] sm:$0xf]
  %v416 = vld [vmem:[%s414 + $0x4] sm:$0xf]
  %v417 = vld [vmem:[%s414 + $0x8] sm:$0xf]
  %v418 = vld [vmem:[%s414 + $0xc] sm:$0xf]
  %v420 = vunpack.c.l.b16 %v309
  %v421 = vpack.c.b16 %v373, %v372
  %v422 = vpack.c.b16 %v420, %v374
  %v427 = vunpack.c.l.b16 %v415
  %v428 = vunpack.c.l.b16 %v416
  %v429 = vunpack.c.l.b16 %v417
  %v430 = vunpack.c.l.b16 %v418
  %v431 = vpack.c.b16 %v428, %v427
  %v432 = vpack.c.b16 %v430, %v429
  %v436 = vsel %vm280, %v421, 0
  %v439 = vsel %vm280, %v422, 0
  %441 = vmatpush.bf16.msra.mxu0 0
  %442 = vmatpush.bf16.msra.mxu0 0
  %443 = vmatpush.bf16.msra.mxu0 0
  %444 = vmatpush.bf16.msra.mxu0 0
  %445 = vmatpush.bf16.msra.mxu0 0
  %446 = vmatpush.bf16.msra.mxu0 0
  %447 = vmatpush.bf16.msra.mxu0 %v432
  %448 = vmatpush.bf16.msra.mxu0 %v431
  %449 = vmatmul.bf16.gmra.mxu0 %v436
  %v450 = vpop.f32.mrf.mxu0
  %v451 = vadd.f32 0.0, %v450
  %v452 = vpop.f32.mrf.mxu0
  %v453 = vadd.f32 0.0, %v452
  %454 = vmatmul.bf16.gmra.mxu0 %v439
  %v455 = vpop.f32.mrf.mxu0
  %v456 = vadd.f32 0.0, %v455
  %v457 = vpop.f32.mrf.mxu0
  %v458 = vadd.f32 0.0, %v457
  %459 = vdwg.mxu0
  %v460 = vadd.f32 %v405, %v451
  %v461 = vadd.f32 %v407, %v453
  %v462 = vadd.f32 %v410, %v456
  %v463 = vadd.f32 %v412, %v458
  %v465 = vperm.slane %v310, 0
  %v467 = vadd.f32 %v460, %v465
  %v468 = vadd.f32 %v461, %v465
  %v469 = vadd.f32 %v462, %v465
  %v470 = vadd.f32 %v463, %v465
  %v471 = vmax.f32 %v467, 0.0
  %v472 = vmax.f32 %v468, 0.0
  %v473 = vmax.f32 %v469, 0.0
  %v474 = vmax.f32 %v470, 0.0
  %475 = vst.msk [vmem:[#allocation3] sm:$0xff] %vm280, %v471
  %476 = vst.msk [vmem:[#allocation3 + $0x8] sm:$0xff] %vm280, %v472
  %477 = vst.msk [vmem:[#allocation3 + $0x10] sm:$0xff] %vm280, %v473
  %478 = vst.msk [vmem:[#allocation3 + $0x18] sm:$0xff] %vm280, %v474
  %v479 = vld [vmem:[#allocation3] sm:$0xff]
  %s480 = scalar_lea.vmem [#allocation3], 8
  %v481 = vld [vmem:[%s480] sm:$0xff]
  %s482 = scalar_lea.vmem [#allocation3], 16
  %v483 = vld [vmem:[%s482] sm:$0xff]
  %s484 = scalar_lea.vmem [#allocation3], 24
  %v485 = vld [vmem:[%s484] sm:$0xff]
  %487 = vrot.lane.b32.xlu0 %v481, 32
  %v488 = vpop.permute.xlu0 %487
  %491 = vrot.lane.b32.xlu0 %v483, 64
  %v492 = vpop.permute.xlu0 %491
  %495 = vrot.lane.b32.xlu0 %v485, 96
  %v496 = vpop.permute.xlu0 %495
  %v498 = vsel %vm280, %v479, %v488
  %vm499 = vcmask 523264
  %v500 = vsel %vm499, %v498, %v492
  %vm501 = vcmask 785408
  %v502 = vsel %vm501, %v500, %v496
  %503 = vst [vmem:[%s11] sm:$0xff] %v502
  %v504 = vld [vmem:[%s5] sm:$0xf]
  %v505 = vpack.c.bf16 %v502, %v502
  %vm506 = vcmask 64512
  %v508 = vsel %vm506, %v504, 0
  %vm510 = vcmask 1043456
  %v512 = vsel %vm510, %v505, 0
  %514 = vmatpush.bf16.msra.mxu0 0
  %515 = vmatpush.bf16.msra.mxu0 0
  %516 = vmatpush.bf16.msra.mxu0 0
  %517 = vmatpush.bf16.msra.mxu0 0
  %518 = vmatpush.bf16.msra.mxu0 0
  %519 = vmatpush.bf16.msra.mxu0 0
  %520 = vmatpush.bf16.msra.mxu0 0
  %521 = vmatpush.bf16.msra.mxu0 %v512
  %522 = vmatmul.bf16.gmra.mxu0 %v508
  %v523 = vpop.f32.mrf.mxu0
  %v524 = vadd.f32 0.0, %v523
  %v525 = vpop.f32.mrf.mxu0
  %526 = vdwg.mxu0
  %527 = vst [vmem:[%s12] sm:$0xff] %v524
  %528 = vst.msk [vmem:[#allocation4] sm:$0xff] %vm280, 0.0
  %s529 = scalar_lea.vmem [#allocation4], 8
  %530 = vst.msk [vmem:[%s529] sm:$0xff] %vm280, %v524
  %532 = vrot.lane.b32.xlu0 %v524, 96
  %v533 = vpop.permute.xlu0 %532
  %s535 = scalar_lea.vmem [#allocation4], 16
  %536 = vst.msk [vmem:[%s535] sm:$0xff] %vm280, %v533
  %537 = vrot.lane.b32.xlu0 %v524, 64
  %v538 = vpop.permute.xlu0 %537
  %s540 = scalar_lea.vmem [#allocation4], 24
  %541 = vst.msk [vmem:[%s540] sm:$0xff] %vm280, %v538
  %542 = vrot.lane.b32.xlu0 %v524, 32
  %v543 = vpop.permute.xlu0 %542
  %s545 = scalar_lea.vmem [#allocation4], 32
  %546 = vst.msk [vmem:[%s545] sm:$0xff] %vm280, %v543
  %v547 = vld [vmem:[#allocation4] sm:$0xff]
  %v548 = vld [vmem:[#allocation4 + $0x8] sm:$0xff]
  %v549 = vld [vmem:[#allocation4 + $0x10] sm:$0xff]
  %v550 = vld [vmem:[#allocation4 + $0x18] sm:$0xff]
  %v551 = vld [vmem:[#allocation4 + $0x20] sm:$0xff]
  %v552 = vpack.c.bf16 %v547, %v547
  %v553 = vpack.c.bf16 %v548, %v548
  %v554 = vpack.c.bf16 %v549, %v549
  %v555 = vpack.c.bf16 %v550, %v550
  %v556 = vpack.c.bf16 %v551, %v551
  %v557 = vld [vmem:[%s7] sm:$0x1]
  %v558 = vld [vmem:[%s6] sm:$0xf]
  %v559 = vld [vmem:[%s6 + $0x4] sm:$0xf]
  %v560 = vld [vmem:[%s6 + $0x8] sm:$0xf]
  %v561 = vld [vmem:[%s6 + $0xc] sm:$0xf]
  %s562 = scalar_lea.vmem %s6, 16
  %v563 = vld [vmem:[%s562] sm:$0xf]
  %v564 = vld [vmem:[%s562 + $0x4] sm:$0xf]
  %v565 = vld [vmem:[%s562 + $0x8] sm:$0xf]
  %v566 = vld [vmem:[%s562 + $0xc] sm:$0xf]
  %v571 = vunpack.c.l.b16 %v552
  %v572 = vunpack.c.l.b16 %v553
  %v573 = vunpack.c.l.b16 %v554
  %v574 = vunpack.c.l.b16 %v555
  %v575 = vpack.c.b16 %v572, %v571
  %v576 = vpack.c.b16 %v574, %v573
  %v581 = vunpack.c.l.b16 %v563
  %v582 = vunpack.c.l.b16 %v564
  %v583 = vunpack.c.l.b16 %v565
  %v584 = vunpack.c.l.b16 %v566
  %v585 = vpack.c.b16 %v582, %v581
  %v586 = vpack.c.b16 %v584, %v583
  %v590 = vsel %vm280, %v575, 0
  %v593 = vsel %vm280, %v576, 0
  %595 = vmatpush.bf16.msra.mxu0 0
  %596 = vmatpush.bf16.msra.mxu0 0
  %597 = vmatpush.bf16.msra.mxu0 0
  %598 = vmatpush.bf16.msra.mxu0 0
  %599 = vmatpush.bf16.msra.mxu0 0
  %600 = vmatpush.bf16.msra.mxu0 0
  %601 = vmatpush.bf16.msra.mxu0 %v586
  %602 = vmatpush.bf16.msra.mxu0 %v585
  %603 = vmatmul.bf16.gmra.mxu0 %v590
  %v604 = vpop.f32.mrf.mxu0
  %v605 = vadd.f32 0.0, %v604
  %v606 = vpop.f32.mrf.mxu0
  %v607 = vadd.f32 0.0, %v606
  %608 = vmatmul.bf16.gmra.mxu0 %v593
  %v609 = vpop.f32.mrf.mxu0
  %v610 = vadd.f32 0.0, %v609
  %v611 = vpop.f32.mrf.mxu0
  %v612 = vadd.f32 0.0, %v611
  %613 = vdwg.mxu0
  %v615 = vunpack.c.l.b16 %v556
  %v616 = vpack.c.b16 %v573, %v572
  %v617 = vpack.c.b16 %v615, %v574
  %v622 = vunpack.c.l.b16 %v558
  %v623 = vunpack.c.l.b16 %v559
  %v624 = vunpack.c.l.b16 %v560
  %v625 = vunpack.c.l.b16 %v561
  %v626 = vpack.c.b16 %v623, %v622
  %v627 = vpack.c.b16 %v625, %v624
  %v631 = vsel %vm280, %v616, 0
  %v634 = vsel %vm280, %v617, 0
  %636 = vmatpush.bf16.msra.mxu0 0
  %637 = vmatpush.bf16.msra.mxu0 0
  %638 = vmatpush.bf16.msra.mxu0 0
  %639 = vmatpush.bf16.msra.mxu0 0
  %640 = vmatpush.bf16.msra.mxu0 0
  %641 = vmatpush.bf16.msra.mxu0 0
  %642 = vmatpush.bf16.msra.mxu0 %v627
  %643 = vmatpush.bf16.msra.mxu0 %v626
  %644 = vmatmul.bf16.gmra.mxu0 %v631
  %v645 = vpop.f32.mrf.mxu0
  %v646 = vadd.f32 %v605, %v645
  %v647 = vpop.f32.mrf.mxu0
  %v648 = vadd.f32 %v607, %v647
  %649 = vmatmul.bf16.gmra.mxu0 %v634
  %v650 = vpop.f32.mrf.mxu0
  %v651 = vadd.f32 %v610, %v650
  %v652 = vpop.f32.mrf.mxu0
  %v653 = vadd.f32 %v612, %v652
  %654 = vdwg.mxu0
  %v656 = vperm.slane %v557, 0
  %v658 = vadd.f32 %v646, %v656
  %v659 = vadd.f32 %v648, %v656
  %v660 = vadd.f32 %v651, %v656
  %v661 = vadd.f32 %v653, %v656
  %s662 = scalar_lea.vmem %s6, 32
  %v663 = vld [vmem:[%s662] sm:$0xf]
  %v664 = vld [vmem:[%s662 + $0x4] sm:$0xf]
  %v665 = vld [vmem:[%s662 + $0x8] sm:$0xf]
  %v666 = vld [vmem:[%s662 + $0xc] sm:$0xf]
  %v671 = vunpack.c.l.b16 %v663
  %v672 = vunpack.c.l.b16 %v664
  %v673 = vunpack.c.l.b16 %v665
  %v674 = vunpack.c.l.b16 %v666
  %v675 = vpack.c.b16 %v672, %v671
  %v676 = vpack.c.b16 %v674, %v673
  %679 = vmatpush.bf16.msra.mxu0 0
  %680 = vmatpush.bf16.msra.mxu0 0
  %681 = vmatpush.bf16.msra.mxu0 0
  %682 = vmatpush.bf16.msra.mxu0 0
  %683 = vmatpush.bf16.msra.mxu0 0
  %684 = vmatpush.bf16.msra.mxu0 0
  %685 = vmatpush.bf16.msra.mxu0 %v676
  %686 = vmatpush.bf16.msra.mxu0 %v675
  %687 = vmatmul.bf16.gmra.mxu0 %v631
  %v688 = vpop.f32.mrf.mxu0
  %v689 = vadd.f32 %v656, %v688
  %v690 = vpop.f32.mrf.mxu0
  %v691 = vadd.f32 %v656, %v690
  %692 = vmatmul.bf16.gmra.mxu0 %v634
  %v693 = vpop.f32.mrf.mxu0
  %v694 = vadd.f32 %v656, %v693
  %v695 = vpop.f32.mrf.mxu0
  %v696 = vadd.f32 %v656, %v695
  %697 = vdwg.mxu0
  %v698 = vmax.f32 %v658, 0.0
  %v699 = vmax.f32 %v659, 0.0
  %v700 = vmax.f32 %v660, 0.0
  %v701 = vmax.f32 %v661, 0.0
  %v702 = vmax.f32 %v689, 0.0
  %v703 = vmax.f32 %v691, 0.0
  %v704 = vmax.f32 %v694, 0.0
  %v705 = vmax.f32 %v696, 0.0
  %706 = vst.msk [vmem:[#allocation5] sm:$0xff] %vm280, 0.0
  %s707 = scalar_lea.vmem [#allocation5], 8
  %708 = vst.msk [vmem:[%s707] sm:$0xff] %vm280, %v698
  %709 = vst.msk [vmem:[%s707 + $0x8] sm:$0xff] %vm280, %v702
  %710 = vst.msk [vmem:[%s707 + $0x10] sm:$0xff] %vm280, %v699
  %711 = vst.msk [vmem:[%s707 + $0x18] sm:$0xff] %vm280, %v703
  %712 = vst.msk [vmem:[%s707 + $0x20] sm:$0xff] %vm280, %v700
  %713 = vst.msk [vmem:[%s707 + $0x28] sm:$0xff] %vm280, %v704
  %714 = vst.msk [vmem:[%s707 + $0x30] sm:$0xff] %vm280, %v701
  %715 = vst.msk [vmem:[%s707 + $0x38] sm:$0xff] %vm280, %v705
  %v716 = vld [vmem:[#allocation5] sm:$0xff]
  %v717 = vld [vmem:[#allocation5 + $0x8] sm:$0xff]
  %v718 = vld [vmem:[#allocation5 + $0x10] sm:$0xff]
  %v719 = vld [vmem:[#allocation5 + $0x18] sm:$0xff]
  %v720 = vld [vmem:[#allocation5 + $0x20] sm:$0xff]
  %v721 = vld [vmem:[#allocation5 + $0x28] sm:$0xff]
  %v722 = vld [vmem:[#allocation5 + $0x30] sm:$0xff]
  %v723 = vld [vmem:[#allocation5 + $0x38] sm:$0xff]
  %v724 = vld [vmem:[#allocation5 + $0x40] sm:$0xff]
  %v725 = vpack.c.bf16 %v716, %v716
  %v726 = vpack.c.bf16 %v717, %v717
  %v727 = vpack.c.bf16 %v718, %v718
  %v728 = vpack.c.bf16 %v719, %v719
  %v729 = vpack.c.bf16 %v720, %v720
  %v730 = vpack.c.bf16 %v721, %v721
  %v731 = vpack.c.bf16 %v722, %v722
  %v732 = vpack.c.bf16 %v723, %v723
  %v733 = vpack.c.bf16 %v724, %v724
  %v734 = vld [vmem:[%s9] sm:$0x1]
  %v735 = vld [vmem:[%s8] sm:$0xf]
  %v736 = vld [vmem:[%s8 + $0x4] sm:$0xf]
  %v737 = vld [vmem:[%s8 + $0x8] sm:$0xf]
  %v738 = vld [vmem:[%s8 + $0xc] sm:$0xf]
  %s739 = scalar_lea.vmem %s8, 16
  %v740 = vld [vmem:[%s739] sm:$0xf]
  %v741 = vld [vmem:[%s739 + $0x4] sm:$0xf]
  %v742 = vld [vmem:[%s739 + $0x8] sm:$0xf]
  %v743 = vld [vmem:[%s739 + $0xc] sm:$0xf]
  %v752 = vunpack.c.l.b16 %v725
  %v753 = vunpack.c.l.b16 %v726
  %v754 = vunpack.c.l.b16 %v727
  %v755 = vunpack.c.l.b16 %v728
  %v756 = vunpack.c.l.b16 %v729
  %v757 = vunpack.c.l.b16 %v730
  %v758 = vunpack.c.l.b16 %v731
  %v759 = vunpack.c.l.b16 %v732
  %v760 = vpack.c.b16 %v753, %v752
  %v761 = vpack.c.b16 %v755, %v754
  %v762 = vpack.c.b16 %v757, %v756
  %v763 = vpack.c.b16 %v759, %v758
  %v768 = vunpack.c.l.b16 %v740
  %v769 = vunpack.c.l.b16 %v741
  %v770 = vunpack.c.l.b16 %v742
  %v771 = vunpack.c.l.b16 %v743
  %v772 = vpack.c.b16 %v769, %v768
  %v773 = vpack.c.b16 %v771, %v770
  %v777 = vsel %vm280, %v760, 0
  %v780 = vsel %vm280, %v761, 0
  %v783 = vsel %vm280, %v762, 0
  %v786 = vsel %vm280, %v763, 0
  %788 = vmatpush.bf16.msra.mxu0 0
  %789 = vmatpush.bf16.msra.mxu0 0
  %790 = vmatpush.bf16.msra.mxu0 0
  %791 = vmatpush.bf16.msra.mxu0 0
  %792 = vmatpush.bf16.msra.mxu0 0
  %793 = vmatpush.bf16.msra.mxu0 0
  %794 = vmatpush.bf16.msra.mxu0 %v773
  %795 = vmatpush.bf16.msra.mxu0 %v772
  %796 = vmatmul.bf16.gmra.mxu0 %v777
  %v797 = vpop.f32.mrf.mxu0
  %v798 = vadd.f32 0.0, %v797
  %v799 = vpop.f32.mrf.mxu0
  %v800 = vadd.f32 0.0, %v799
  %801 = vmatmul.bf16.gmra.mxu0 %v780
  %v802 = vpop.f32.mrf.mxu0
  %v803 = vadd.f32 0.0, %v802
  %v804 = vpop.f32.mrf.mxu0
  %v805 = vadd.f32 0.0, %v804
  %806 = vmatmul.bf16.gmra.mxu0 %v783
  %v807 = vpop.f32.mrf.mxu0
  %v808 = vadd.f32 0.0, %v807
  %v809 = vpop.f32.mrf.mxu0
  %v810 = vadd.f32 0.0, %v809
  %811 = vmatmul.bf16.gmra.mxu0 %v786
  %v812 = vpop.f32.mrf.mxu0
  %v813 = vadd.f32 0.0, %v812
  %v814 = vpop.f32.mrf.mxu0
  %v815 = vadd.f32 0.0, %v814
  %816 = vdwg.mxu0
  %v818 = vunpack.c.l.b16 %v733
  %v819 = vpack.c.b16 %v754, %v753
  %v820 = vpack.c.b16 %v756, %v755
  %v821 = vpack.c.b16 %v758, %v757
  %v822 = vpack.c.b16 %v818, %v759
  %v827 = vunpack.c.l.b16 %v735
  %v828 = vunpack.c.l.b16 %v736
  %v829 = vunpack.c.l.b16 %v737
  %v830 = vunpack.c.l.b16 %v738
  %v831 = vpack.c.b16 %v828, %v827
  %v832 = vpack.c.b16 %v830, %v829
  %v836 = vsel %vm280, %v819, 0
  %v839 = vsel %vm280, %v820, 0
  %v842 = vsel %vm280, %v821, 0
  %v845 = vsel %vm280, %v822, 0
  %847 = vmatpush.bf16.msra.mxu0 0
  %848 = vmatpush.bf16.msra.mxu0 0
  %849 = vmatpush.bf16.msra.mxu0 0
  %850 = vmatpush.bf16.msra.mxu0 0
  %851 = vmatpush.bf16.msra.mxu0 0
  %852 = vmatpush.bf16.msra.mxu0 0
  %853 = vmatpush.bf16.msra.mxu0 %v832
  %854 = vmatpush.bf16.msra.mxu0 %v831
  %855 = vmatmul.bf16.gmra.mxu0 %v836
  %v856 = vpop.f32.mrf.mxu0
  %v857 = vadd.f32 %v798, %v856
  %v858 = vpop.f32.mrf.mxu0
  %v859 = vadd.f32 %v800, %v858
  %860 = vmatmul.bf16.gmra.mxu0 %v839
  %v861 = vpop.f32.mrf.mxu0
  %v862 = vadd.f32 %v803, %v861
  %v863 = vpop.f32.mrf.mxu0
  %v864 = vadd.f32 %v805, %v863
  %865 = vmatmul.bf16.gmra.mxu0 %v842
  %v866 = vpop.f32.mrf.mxu0
  %v867 = vadd.f32 %v808, %v866
  %v868 = vpop.f32.mrf.mxu0
  %v869 = vadd.f32 %v810, %v868
  %870 = vmatmul.bf16.gmra.mxu0 %v845
  %v871 = vpop.f32.mrf.mxu0
  %v872 = vadd.f32 %v813, %v871
  %v873 = vpop.f32.mrf.mxu0
  %v874 = vadd.f32 %v815, %v873
  %875 = vdwg.mxu0
  %v877 = vperm.slane %v734, 0
  %v879 = vadd.f32 %v857, %v877
  %v880 = vadd.f32 %v859, %v877
  %v881 = vadd.f32 %v862, %v877
  %v882 = vadd.f32 %v864, %v877
  %v883 = vadd.f32 %v867, %v877
  %v884 = vadd.f32 %v869, %v877
  %v885 = vadd.f32 %v872, %v877
  %v886 = vadd.f32 %v874, %v877
  %s887 = scalar_lea.vmem %s8, 32
  %v888 = vld [vmem:[%s887] sm:$0xf]
  %v889 = vld [vmem:[%s887 + $0x4] sm:$0xf]
  %v890 = vld [vmem:[%s887 + $0x8] sm:$0xf]
  %v891 = vld [vmem:[%s887 + $0xc] sm:$0xf]
  %v896 = vunpack.c.l.b16 %v888
  %v897 = vunpack.c.l.b16 %v889
  %v898 = vunpack.c.l.b16 %v890
  %v899 = vunpack.c.l.b16 %v891
  %v900 = vpack.c.b16 %v897, %v896
  %v901 = vpack.c.b16 %v899, %v898
  %904 = vmatpush.bf16.msra.mxu0 0
  %905 = vmatpush.bf16.msra.mxu0 0
  %906 = vmatpush.bf16.msra.mxu0 0
  %907 = vmatpush.bf16.msra.mxu0 0
  %908 = vmatpush.bf16.msra.mxu0 0
  %909 = vmatpush.bf16.msra.mxu0 0
  %910 = vmatpush.bf16.msra.mxu0 %v901
  %911 = vmatpush.bf16.msra.mxu0 %v900
  %912 = vmatmul.bf16.gmra.mxu0 %v836
  %v913 = vpop.f32.mrf.mxu0
  %v914 = vadd.f32 %v877, %v913
  %v915 = vpop.f32.mrf.mxu0
  %v916 = vadd.f32 %v877, %v915
  %917 = vmatmul.bf16.gmra.mxu0 %v839
  %v918 = vpop.f32.mrf.mxu0
  %v919 = vadd.f32 %v877, %v918
  %v920 = vpop.f32.mrf.mxu0
  %v921 = vadd.f32 %v877, %v920
  %922 = vmatmul.bf16.gmra.mxu0 %v842
  %v923 = vpop.f32.mrf.mxu0
  %v924 = vadd.f32 %v877, %v923
  %v925 = vpop.f32.mrf.mxu0
  %v926 = vadd.f32 %v877, %v925
  %927 = vmatmul.bf16.gmra.mxu0 %v845
  %v928 = vpop.f32.mrf.mxu0
  %v929 = vadd.f32 %v877, %v928
  %v930 = vpop.f32.mrf.mxu0
  %v931 = vadd.f32 %v877, %v930
  %932 = vdwg.mxu0
  %v933 = vmax.f32 %v879, 0.0
  %v934 = vmax.f32 %v880, 0.0
  %v935 = vmax.f32 %v881, 0.0
  %v936 = vmax.f32 %v882, 0.0
  %v937 = vmax.f32 %v883, 0.0
  %v938 = vmax.f32 %v884, 0.0
  %v939 = vmax.f32 %v885, 0.0
  %v940 = vmax.f32 %v886, 0.0
  %v941 = vmax.f32 %v914, 0.0
  %v942 = vmax.f32 %v916, 0.0
  %v943 = vmax.f32 %v919, 0.0
  %v944 = vmax.f32 %v921, 0.0
  %v945 = vmax.f32 %v924, 0.0
  %v946 = vmax.f32 %v926, 0.0
  %v947 = vmax.f32 %v929, 0.0
  %v948 = vmax.f32 %v931, 0.0
  %950 = vrot.lane.b32.xlu0 %v941, 16
  %v951 = vpop.permute.xlu0 %950
  %954 = vrot.lane.b32.xlu0 %v934, 32
  %v955 = vpop.permute.xlu0 %954
  %958 = vrot.lane.b32.xlu0 %v942, 48
  %v959 = vpop.permute.xlu0 %958
  %962 = vrot.lane.b32.xlu0 %v935, 64
  %v963 = vpop.permute.xlu0 %962
  %966 = vrot.lane.b32.xlu0 %v943, 80
  %v967 = vpop.permute.xlu0 %966
  %970 = vrot.lane.b32.xlu0 %v936, 96
  %v971 = vpop.permute.xlu0 %970
  %974 = vrot.lane.b32.xlu0 %v944, 112
  %v975 = vpop.permute.xlu0 %974
  %978 = vrot.lane.b32.xlu0 %v945, 16
  %v979 = vpop.permute.xlu0 %978
  %982 = vrot.lane.b32.xlu0 %v938, 32
  %v983 = vpop.permute.xlu0 %982
  %986 = vrot.lane.b32.xlu0 %v946, 48
  %v987 = vpop.permute.xlu0 %986
  %990 = vrot.lane.b32.xlu0 %v939, 64
  %v991 = vpop.permute.xlu0 %990
  %994 = vrot.lane.b32.xlu0 %v947, 80
  %v995 = vpop.permute.xlu0 %994
  %998 = vrot.lane.b32.xlu0 %v940, 96
  %v999 = vpop.permute.xlu0 %998
  %1002 = vrot.lane.b32.xlu0 %v948, 112
  %v1003 = vpop.permute.xlu0 %1002
  %v1005 = vsel %vm88, %v933, %v951
  %v1006 = vsel %vm280, %v1005, %v955
  %vm1007 = vcmask 392192
  %v1008 = vsel %vm1007, %v1006, %v959
  %v1009 = vsel %vm499, %v1008, %v963
  %vm1010 = vcmask 654336
  %v1011 = vsel %vm1010, %v1009, %v967
  %v1012 = vsel %vm501, %v1011, %v971
  %vm1013 = vcmask 916480
  %v1014 = vsel %vm1013, %v1012, %v975
  %v1015 = vsel %vm88, %v937, %v979
  %v1016 = vsel %vm280, %v1015, %v983
  %v1017 = vsel %vm1007, %v1016, %v987
  %v1018 = vsel %vm499, %v1017, %v991
  %v1019 = vsel %vm1010, %v1018, %v995
  %v1020 = vsel %vm501, %v1019, %v999
  %v1021 = vsel %vm1013, %v1020, %v1003
  %1022 = vst [vmem:[%s10] sm:$0xff] %v1014
  %1023 = vst [vmem:[%s10 + $0x8] sm:$0xff] %v1021
  // Predicated region
  $region42: #{dscnet_forward.1} parent=0 // pred_check
    _
  $region43: #{dscnet_forward.1} parent=0 // pred_check_branch
    %1025 = sbr.rel (0) target = $region45
  $region44: #{dscnet_forward.1} parent=0 // pred_region
    _
  $region45: #{dscnet_forward.1} parent=0 // pred_fallthru
    _
  // Predicated region
  $region46: #{dscnet_forward.1} parent=0 // pred_check
    _
  $region47: #{dscnet_forward.1} parent=0 // pred_check_branch
    %1027 = sbr.rel (0) target = $region49
  $region48: #{dscnet_forward.1} parent=0 // pred_region
    _
  $region49: #{dscnet_forward.1} parent=0 // pred_fallthru
    _
  // Predicated region
  $region50: #{dscnet_forward.1} parent=0 // pred_check
    _
  $region51: #{dscnet_forward.1} parent=0 // pred_check_branch
    %1029 = sbr.rel (0) target = $region53
  $region52: #{dscnet_forward.1} parent=0 // pred_region
    _
  $region53: #{dscnet_forward.1} parent=0 // pred_fallthru
    _
  // Predicated region
  $region54: #{dscnet_forward.1} parent=0 // pred_check
    _
  $region55: #{dscnet_forward.1} parent=0 // pred_check_branch
    %1031 = sbr.rel (0) target = $region57
  $region56: #{dscnet_forward.1} parent=0 // pred_region
    _
  $region57: #{dscnet_forward.1} parent=0 // pred_fallthru
    _
  // Predicated region
  $region58: #{dscnet_forward.1} parent=0 // pred_check
    _
  $region59: #{dscnet_forward.1} parent=0 // pred_check_branch
    %1033 = sbr.rel (0) target = $region61
  $region60: #{dscnet_forward.1} parent=0 // pred_region
    _
  $region61: #{dscnet_forward.1} parent=0 // pred_fallthru
    _
  // Predicated region
  $region62: #{dscnet_forward.1} parent=0 // pred_check
    _
  $region63: #{dscnet_forward.1} parent=0 // pred_check_branch
    %1035 = sbr.rel (0) target = $region65
  $region64: #{dscnet_forward.1} parent=0 // pred_region
    _
  $region65: #{dscnet_forward.1} parent=0 // pred_fallthru
    _

</llo_original>
